<compile_context>
chip_gen: v5e
topology: v5e:2x2
jax: 0.10.0
libtpu: 0.0.40
codegen_flags: <defaults>
</compile_context>

<pallas_src>
import functools

import jax
import jax.numpy as jnp
from jax import lax
from jax.experimental import pallas as pl
from jax.experimental.pallas import tpu as pltpu


def _round_up(x, m):
    return ((x + m - 1) // m) * m


# ----------------------------- Pallas kernels ------------------------------

def _concat_conv_kernel(xp_ref, xc_ref, dww_ref, dwsc_ref, dwsh_ref,
                        pww_ref, pwsc_ref, pwsh_ref, o_ref, pad_ref, *, H, W):
    """Fused InvertedResidual(2C->C, s1, expand=1) + outer ReLU6, one
    (frame-pair, batch) element per grid step.

      xp_ref / xc_ref : (1, 1, H, W, C)   frames t-1 and t (two views of base)
      dww_ref         : (2, 9, C)         depthwise 3x3 weights per frame half
      dwsc / dwsh     : (2, C)            folded BN scale / shift per half
      pww_ref         : (2, C, Cout) bf16 1x1 weights per half
      pwsc / pwsh     : (1, Cout)         folded BN scale / shift
      pad_ref         : (2, H+2, Wp, C)   VMEM scratch (zero halo, Wp % 8 == 0)
    """
    Cin = xp_ref.shape[-1]
    Cout = o_ref.shape[-1]

    # Zero-pad both frames inside VMEM: no jnp.pad / HBM channel concat.
    pad_ref[...] = jnp.zeros_like(pad_ref)
    pad_ref[0, 1:1 + H, 1:1 + W, :] = xp_ref[0, 0]
    pad_ref[1, 1:1 + H, 1:1 + W, :] = xc_ref[0, 0]

    dww = dww_ref[...]                                        # (2, 9, Cin)

    halves = []
    for half in range(2):                                     # prev, curr
        acc = jnp.zeros((H, W, Cin), jnp.float32)
        for dh in range(3):
            for dw in range(3):
                tap = pad_ref[half, dh:dh + H, dw:dw + W, :]
                acc = acc + tap * dww[half, dh * 3 + dw]
        h = jnp.clip(acc * dwsc_ref[half] + dwsh_ref[half], 0.0, 6.0)
        halves.append(h.reshape(H * W, Cin).astype(jnp.bfloat16))

    # 1x1 over the concatenated 2C channels == sum of two MXU dots (one per
    # half), f32 accumulation; folded BN + outer ReLU6 fused.
    y = jnp.dot(halves[0], pww_ref[0], preferred_element_type=jnp.float32)
    y = y + jnp.dot(halves[1], pww_ref[1], preferred_element_type=jnp.float32)
    y = jnp.clip(y * pwsc_ref[...] + pwsh_ref[...], 0.0, 6.0)
    o_ref[...] = y.reshape(1, 1, H, W, Cout).astype(o_ref.dtype)


def concat_conv_pallas(base_nhwc, p):
    """base_nhwc: (T, B, H, W, C) -> fused frames (T-1, B, H, W, C)."""
    T, B, H, W, C = base_nhwc.shape
    Wp = _round_up(W + 2, 8)

    dww = p["dw_w"].reshape(9, 2 * C)
    dww = jnp.stack([dww[:, :C], dww[:, C:]], axis=0)          # (2, 9, C)
    dwsc = p["dw_scale"].reshape(2, C)
    dwsh = p["dw_shift"].reshape(2, C)
    pww = p["pw_w"].reshape(2, C, C).astype(jnp.bfloat16)      # bf16 weights
    pwsc = p["pw_scale"].reshape(1, C)
    pwsh = p["pw_shift"].reshape(1, C)

    kernel = functools.partial(_concat_conv_kernel, H=H, W=W)
    return pl.pallas_call(
        kernel,
        out_shape=jax.ShapeDtypeStruct((T - 1, B, H, W, C), base_nhwc.dtype),
        grid=(T - 1, B),
        in_specs=[
            # two views of the same base tensor: frame t and frame t+1
            pl.BlockSpec((1, 1, H, W, C), lambda t, b: (t, b, 0, 0, 0)),
            pl.BlockSpec((1, 1, H, W, C), lambda t, b: (t + 1, b, 0, 0, 0)),
            pl.BlockSpec((2, 9, C), lambda t, b: (0, 0, 0)),
            pl.BlockSpec((2, C), lambda t, b: (0, 0)),
            pl.BlockSpec((2, C), lambda t, b: (0, 0)),
            pl.BlockSpec((2, C, C), lambda t, b: (0, 0, 0)),
            pl.BlockSpec((1, C), lambda t, b: (0, 0)),
            pl.BlockSpec((1, C), lambda t, b: (0, 0)),
        ],
        out_specs=pl.BlockSpec((1, 1, H, W, C), lambda t, b: (t, b, 0, 0, 0)),
        scratch_shapes=[pltpu.VMEM((2, H + 2, Wp, C), jnp.float32)],
        compiler_params=pltpu.CompilerParams(
            dimension_semantics=("parallel", "parallel")),
    )(base_nhwc, base_nhwc, dww, dwsc, dwsh, pww, pwsc, pwsh)


def _extra_conv_kernel(x_ref, w1_ref, b1_ref, w2_ref, b2_ref, o_ref, pad_ref,
                       *, H, W, Ho, Wo):
    """Fused ExtraConv (1x1+bias+ReLU6 -> 3x3 s2 p1 + bias) + outer ReLU6,
    one image per grid step.

      x_ref  : (1, H, W, Cin)
      w1_ref : (Cin, mid) bf16        b1_ref : (1, mid)
      w2_ref : (9, mid, Cout) bf16    b2_ref : (1, Cout)
      pad_ref: (H+2, Wp, mid) VMEM scratch holding the zero-padded 1x1 output.
    """
    Cin = x_ref.shape[-1]
    mid = w1_ref.shape[-1]
    Cout = o_ref.shape[-1]

    # 1x1 conv + bias + ReLU6 (bf16 MXU dot, f32 accumulation).
    x = x_ref[0].reshape(H * W, Cin).astype(jnp.bfloat16)
    h1 = jnp.dot(x, w1_ref[...], preferred_element_type=jnp.float32)
    h1 = jnp.clip(h1 + b1_ref[...], 0.0, 6.0)

    # Intermediate never leaves VMEM: zero-pad into the scratch.
    pad_ref[...] = jnp.zeros_like(pad_ref)
    pad_ref[1:1 + H, 1:1 + W, :] = h1.reshape(H, W, mid)

    # 3x3 stride-2 conv as 9 MXU dots over stride-2 views (in-VMEM "im2col").
    acc = jnp.zeros((Ho * Wo, Cout), jnp.float32)
    for dh in range(3):
        for dw in range(3):
            tap = pad_ref[pl.ds(dh, Ho, stride=2), pl.ds(dw, Wo, stride=2), :]
            acc = acc + jnp.dot(
                tap.reshape(Ho * Wo, mid).astype(jnp.bfloat16),
                w2_ref[dh * 3 + dw],
                preferred_element_type=jnp.float32)
    y = jnp.clip(acc + b2_ref[...], 0.0, 6.0)                  # outer F.relu6
    o_ref[...] = y.reshape(1, Ho, Wo, Cout).astype(o_ref.dtype)


def extra_conv_pallas(x_nhwc, p):
    """x_nhwc: (N, H, W, Cin) -> (N, Ho, Wo, Cout), 3x3 stride 2 pad 1."""
    N, H, W, Cin = x_nhwc.shape
    mid = p["w1"].shape[1]
    Cout = p["w2"].shape[-1]
    Ho = (H + 2 - 3) // 2 + 1
    Wo = (W + 2 - 3) // 2 + 1
    Wp = _round_up(W + 2, 8)

    w1 = p["w1"].astype(jnp.bfloat16)
    w2 = p["w2"].reshape(9, mid, Cout).astype(jnp.bfloat16)
    b1 = p["b1"].reshape(1, mid)
    b2 = p["b2"].reshape(1, Cout)

    kernel = functools.partial(_extra_conv_kernel, H=H, W=W, Ho=Ho, Wo=Wo)
    return pl.pallas_call(
        kernel,
        out_shape=jax.ShapeDtypeStruct((N, Ho, Wo, Cout), x_nhwc.dtype),
        grid=(N,),
        in_specs=[
            pl.BlockSpec((1, H, W, Cin), lambda n: (n, 0, 0, 0)),
            pl.BlockSpec((Cin, mid), lambda n: (0, 0)),
            pl.BlockSpec((1, mid), lambda n: (0, 0)),
            pl.BlockSpec((9, mid, Cout), lambda n: (0, 0, 0)),
            pl.BlockSpec((1, Cout), lambda n: (0, 0)),
        ],
        out_specs=pl.BlockSpec((1, Ho, Wo, Cout), lambda n: (n, 0, 0, 0)),
        scratch_shapes=[pltpu.VMEM((H + 2, Wp, mid), jnp.float32)],
        compiler_params=pltpu.CompilerParams(dimension_semantics=("parallel",)),
    )(x_nhwc, w1, b1, w2, b2)


# ------------------------------ module forward -------------------------------

def simple_concat_forward(inputs_list, params, start_level=1,
                          concat_fn=concat_conv_pallas,
                          extra_fn=extra_conv_pallas):
    outs = []
    for i in range(start_level):
        t_i, b_i, c_i, h_i, w_i = inputs_list[i].shape
        outs.append(inputs_list[i].reshape(t_i * b_i, c_i, h_i, w_i))

    base = inputs_list[start_level]                          # (T, B, C, H, W)
    T, B, C, H, W = base.shape
    base_nhwc = jnp.transpose(base, (0, 1, 3, 4, 2))         # NHWC once at entry

    if T > 1:
        fused = concat_fn(base_nhwc, params["concat_conv"])  # (T-1, B, H, W, C)
        feats = jnp.concatenate(
            [base_nhwc[0], fused.reshape((T - 1) * B, H, W, C)], axis=0)
    else:
        feats = base_nhwc[0]
    outs.append(jnp.transpose(feats, (0, 3, 1, 2)))          # NCHW at boundary

    for p in params["extra"]:
        feats = extra_fn(feats, p)                           # stays NHWC
        outs.append(jnp.transpose(feats, (0, 3, 1, 2)))      # NCHW at boundary
    return outs, None


# ------------------------------ pure-JAX reference ---------------------------
# Matmul-like ops use the same bf16-operand / f32-accumulate quantization
# points as the kernels so the comparison tolerance can stay tight.

def _ref_concat_conv(base_nhwc, p):
    T, B, H, W, C = base_nhwc.shape
    prev = base_nhwc[:-1].reshape((T - 1) * B, H, W, C)
    curr = base_nhwc[1:].reshape((T - 1) * B, H, W, C)
    x = jnp.concatenate([prev, curr], axis=-1)               # (., H, W, 2C)
    h = lax.conv_general_dilated(
        x, p["dw_w"].reshape(3, 3, 1, 2 * C), (1, 1), ((1, 1), (1, 1)),
        dimension_numbers=("NHWC", "HWIO", "NHWC"),
        feature_group_count=2 * C, precision=lax.Precision.HIGHEST)
    h = jnp.clip(h * p["dw_scale"] + p["dw_shift"], 0.0, 6.0)
    y = lax.conv_general_dilated(
        h.astype(jnp.bfloat16),
        p["pw_w"].reshape(1, 1, 2 * C, C).astype(jnp.bfloat16),
        (1, 1), ((0, 0), (0, 0)),
        dimension_numbers=("NHWC", "HWIO", "NHWC"),
        preferred_element_type=jnp.float32)
    y = jnp.clip(y * p["pw_scale"] + p["pw_shift"], 0.0, 6.0)
    return y.reshape(T - 1, B, H, W, C)


def _ref_extra_conv(x_nhwc, p):
    h = lax.conv_general_dilated(
        x_nhwc.astype(jnp.bfloat16),
        p["w1"].reshape(1, 1, *p["w1"].shape).astype(jnp.bfloat16),
        (1, 1), ((0, 0), (0, 0)),
        dimension_numbers=("NHWC", "HWIO", "NHWC"),
        preferred_element_type=jnp.float32) + p["b1"]
    h = jnp.clip(h, 0.0, 6.0)
    y = lax.conv_general_dilated(
        h.astype(jnp.bfloat16), p["w2"].astype(jnp.bfloat16),
        (2, 2), ((1, 1), (1, 1)),
        dimension_numbers=("NHWC", "HWIO", "NHWC"),
        preferred_element_type=jnp.float32) + p["b2"]
    return jnp.clip(y, 0.0, 6.0)


# ------------------------------ parameter init -------------------------------

def init_params(key, in_channels, start_level):
    ks = iter(jax.random.split(key, 64))

    def nrm(shape, s):
        return (s * jax.random.normal(next(ks), shape)).astype(jnp.float32)

    def bn_fold(c):
        gamma = 1.0 + nrm((c,), 0.1)
        beta = nrm((c,), 0.1)
        mean = nrm((c,), 0.1)
        var = 1.0 + jnp.abs(nrm((c,), 0.1))
        scale = gamma * lax.rsqrt(var + 1e-5)
        return scale.astype(jnp.float32), (beta - mean * scale).astype(jnp.float32)

    C = in_channels[start_level]
    dw_scale, dw_shift = bn_fold(2 * C)
    pw_scale, pw_shift = bn_fold(C)
    params = {
        "concat_conv": {
            "dw_w": nrm((3, 3, 2 * C), 0.3),      # depthwise, HWC
            "dw_scale": dw_scale, "dw_shift": dw_shift,
            "pw_w": nrm((2 * C, C), 0.2),         # 1x1, (Cin, Cout)
            "pw_scale": pw_scale, "pw_shift": pw_shift,
        },
        "extra": [],
    }
    for i in range(start_level + 1, len(in_channels)):
        in_c, out_c = in_channels[i - 1], in_channels[i]
        mid = out_c // 2
        params["extra"].append({
            "w1": nrm((in_c, mid), 0.2), "b1": nrm((mid,), 0.1),
            "w2": nrm((3, 3, mid, out_c), 0.2), "b2": nrm((out_c,), 0.1),
        })
    return params


# ----------------------------------- main ------------------------------------

if __name__ == "__main__":
    in_channels = (8, 16, 16, 8)      # small stand-in for (576,1280,512,256,256,128)
    start_level = 1
    T, B = 3, 2

    key = jax.random.PRNGKey(0)
    kp, k0, k1 = jax.random.split(key, 3)
    params = init_params(kp, in_channels, start_level)

    # inputs_list[i]: (T, B, C_i, H_i, W_i), NCHW per frame (PyTorch convention)
    x0 = jax.random.normal(k0, (T, B, in_channels[0], 16, 16), jnp.float32)
    x1 = jax.random.normal(k1, (T, B, in_channels[1], 8, 8), jnp.float32)
    inputs_list = [x0, x1]

    outs, aux = simple_concat_forward(inputs_list, params, start_level)
    outs = jax.block_until_ready(outs)
    assert aux is None

    ref_outs, _ = simple_concat_forward(inputs_list, params, start_level,
                                        concat_fn=_ref_concat_conv,
                                        extra_fn=_ref_extra_conv)

    expected = [(T * B, 8, 16, 16), (T * B, 16, 8, 8),
                (T * B, 16, 4, 4), (T * B, 8, 2, 2)]
    assert len(outs) == len(expected)
    for o, r, s in zip(outs, ref_outs, expected):
        assert o.shape == s, (o.shape, s)
        assert o.dtype == jnp.float32
        assert bool(jnp.all(jnp.isfinite(o)))
        assert bool(jnp.allclose(o, r, atol=2e-2, rtol=2e-2))

    print("KERNEL_OK")
</pallas_src>

<mosaic_0001>
module attributes {stable_mosaic.version = 11 : i64} {
  func.func @_concat_conv_kernel(%arg0: i32, %arg1: i32, %arg2: memref<1x1x8x8x16xf32, #tpu.memory_space<vmem>>, %arg3: memref<1x1x8x8x16xf32, #tpu.memory_space<vmem>>, %arg4: memref<2x9x16xf32, #tpu.memory_space<vmem>>, %arg5: memref<2x16xf32, #tpu.memory_space<vmem>>, %arg6: memref<2x16xf32, #tpu.memory_space<vmem>>, %arg7: memref<2x16x16xbf16, #tpu.memory_space<vmem>>, %arg8: memref<1x16xf32, #tpu.memory_space<vmem>>, %arg9: memref<1x16xf32, #tpu.memory_space<vmem>>, %arg10: memref<1x1x8x8x16xf32, #tpu.memory_space<vmem>>, %arg11: memref<2x10x16x16xf32, #tpu.memory_space<vmem>>) attributes {dimension_semantics = [#tpu.dimension_semantics<parallel>, #tpu.dimension_semantics<parallel>], iteration_bounds = array<i64: 2, 2>, scalar_prefetch = 0 : i64, scratch_operands = 1 : i64, tpu.core_type = #tpu.core_type<tc>, window_params = [{transform_indices = @transform_0, window_bounds = array<i64: 1, 1, 8, 8, 16>}, {transform_indices = @transform_1, window_bounds = array<i64: 1, 1, 8, 8, 16>}, {pipeline_mode = #tpu.pipeline_mode<synchronous>, transform_indices = @transform_2, window_bounds = array<i64: 2, 9, 16>}, {pipeline_mode = #tpu.pipeline_mode<synchronous>, transform_indices = @transform_3, window_bounds = array<i64: 2, 16>}, {pipeline_mode = #tpu.pipeline_mode<synchronous>, transform_indices = @transform_4, window_bounds = array<i64: 2, 16>}, {pipeline_mode = #tpu.pipeline_mode<synchronous>, transform_indices = @transform_5, window_bounds = array<i64: 2, 16, 16>}, {pipeline_mode = #tpu.pipeline_mode<synchronous>, transform_indices = @transform_6, window_bounds = array<i64: 1, 16>}, {pipeline_mode = #tpu.pipeline_mode<synchronous>, transform_indices = @transform_7, window_bounds = array<i64: 1, 16>}, {transform_indices = @transform_8, window_bounds = array<i64: 1, 1, 8, 8, 16>}]} {
    %cst = arith.constant 0.000000e+00 : f32
    %0 = vector.broadcast %cst : f32 to vector<2x10x16x16xf32>
    %c0 = arith.constant 0 : index
    %c0_0 = arith.constant 0 : index
    %c0_1 = arith.constant 0 : index
    %c0_2 = arith.constant 0 : index
    %1 = vector.load %arg11[%c0, %c0_0, %c0_1, %c0_2] : memref<2x10x16x16xf32, #tpu.memory_space<vmem>>, vector<2x10x16x16xf32>
    tpu.vector_store %arg11[%c0, %c0_0, %c0_1, %c0_2], %0 {strides = array<i32>} : memref<2x10x16x16xf32, #tpu.memory_space<vmem>>, vector<2x10x16x16xf32>,
    %c0_3 = arith.constant 0 : index
    %c0_4 = arith.constant 0 : index
    %c0_5 = arith.constant 0 : index
    %c0_6 = arith.constant 0 : index
    %c0_7 = arith.constant 0 : index
    %2 = vector.load %arg2[%c0_3, %c0_4, %c0_5, %c0_6, %c0_7] : memref<1x1x8x8x16xf32, #tpu.memory_space<vmem>>, vector<1x1x8x8x16xf32>
    %3 = vector.shape_cast %2 : vector<1x1x8x8x16xf32> to vector<8x8x16xf32>
    %c0_8 = arith.constant 0 : index
    %c1 = arith.constant 1 : index
    %c1_9 = arith.constant 1 : index
    %c0_10 = arith.constant 0 : index
    %4 = vector.load %arg11[%c0_8, %c1, %c1_9, %c0_10] : memref<2x10x16x16xf32, #tpu.memory_space<vmem>>, vector<1x8x8x16xf32>
    %5 = vector.shape_cast %4 : vector<1x8x8x16xf32> to vector<8x8x16xf32>
    %6 = vector.shape_cast %3 : vector<8x8x16xf32> to vector<1x8x8x16xf32>
    tpu.vector_store %arg11[%c0_8, %c1, %c1_9, %c0_10], %6 {strides = array<i32>} : memref<2x10x16x16xf32, #tpu.memory_space<vmem>>, vector<1x8x8x16xf32>,
    %c0_11 = arith.constant 0 : index
    %c0_12 = arith.constant 0 : index
    %c0_13 = arith.constant 0 : index
    %c0_14 = arith.constant 0 : index
    %c0_15 = arith.constant 0 : index
    %7 = vector.load %arg3[%c0_11, %c0_12, %c0_13, %c0_14, %c0_15] : memref<1x1x8x8x16xf32, #tpu.memory_space<vmem>>, vector<1x1x8x8x16xf32>
    %8 = vector.shape_cast %7 : vector<1x1x8x8x16xf32> to vector<8x8x16xf32>
    %c1_16 = arith.constant 1 : index
    %c1_17 = arith.constant 1 : index
    %c1_18 = arith.constant 1 : index
    %c0_19 = arith.constant 0 : index
    %9 = vector.load %arg11[%c1_16, %c1_17, %c1_18, %c0_19] : memref<2x10x16x16xf32, #tpu.memory_space<vmem>>, vector<1x8x8x16xf32>
    %10 = vector.shape_cast %9 : vector<1x8x8x16xf32> to vector<8x8x16xf32>
    %11 = vector.shape_cast %8 : vector<8x8x16xf32> to vector<1x8x8x16xf32>
    tpu.vector_store %arg11[%c1_16, %c1_17, %c1_18, %c0_19], %11 {strides = array<i32>} : memref<2x10x16x16xf32, #tpu.memory_space<vmem>>, vector<1x8x8x16xf32>,
    %c0_20 = arith.constant 0 : index
    %c0_21 = arith.constant 0 : index
    %c0_22 = arith.constant 0 : index
    %12 = vector.load %arg4[%c0_20, %c0_21, %c0_22] : memref<2x9x16xf32, #tpu.memory_space<vmem>>, vector<2x9x16xf32>
    %cst_23 = arith.constant 0.000000e+00 : f32
    %13 = vector.broadcast %cst_23 : f32 to vector<8x8x16xf32>
    %c0_24 = arith.constant 0 : index
    %c0_25 = arith.constant 0 : index
    %c0_26 = arith.constant 0 : index
    %c0_27 = arith.constant 0 : index
    %14 = vector.load %arg11[%c0_24, %c0_25, %c0_26, %c0_27] : memref<2x10x16x16xf32, #tpu.memory_space<vmem>>, vector<1x8x8x16xf32>
    %15 = vector.shape_cast %14 : vector<1x8x8x16xf32> to vector<8x8x16xf32>
    %16 = vector.extract_strided_slice %12 {offsets = [0, 0, 0], sizes = [1, 1, 16], strides = [1, 1, 1]} : vector<2x9x16xf32> to vector<1x1x16xf32>
    %17 = vector.shape_cast %16 : vector<1x1x16xf32> to vector<16xf32>
    %18 = vector.shape_cast %17 : vector<16xf32> to vector<1x1x16xf32>
    %19 = vector.broadcast %18 : vector<1x1x16xf32> to vector<8x8x16xf32>
    %20 = arith.mulf %15, %19 : vector<8x8x16xf32>
    %21 = arith.addf %13, %20 : vector<8x8x16xf32>
    %c0_28 = arith.constant 0 : index
    %c0_29 = arith.constant 0 : index
    %c1_30 = arith.constant 1 : index
    %c0_31 = arith.constant 0 : index
    %22 = vector.load %arg11[%c0_28, %c0_29, %c1_30, %c0_31] : memref<2x10x16x16xf32, #tpu.memory_space<vmem>>, vector<1x8x8x16xf32>
    %23 = vector.shape_cast %22 : vector<1x8x8x16xf32> to vector<8x8x16xf32>
    %24 = vector.extract_strided_slice %12 {offsets = [0, 1, 0], sizes = [1, 1, 16], strides = [1, 1, 1]} : vector<2x9x16xf32> to vector<1x1x16xf32>
    %25 = vector.shape_cast %24 : vector<1x1x16xf32> to vector<16xf32>
    %26 = vector.shape_cast %25 : vector<16xf32> to vector<1x1x16xf32>
    %27 = vector.broadcast %26 : vector<1x1x16xf32> to vector<8x8x16xf32>
    %28 = arith.mulf %23, %27 : vector<8x8x16xf32>
    %29 = arith.addf %21, %28 : vector<8x8x16xf32>
    %c0_32 = arith.constant 0 : index
    %c0_33 = arith.constant 0 : index
    %c2 = arith.constant 2 : index
    %c0_34 = arith.constant 0 : index
    %30 = vector.load %arg11[%c0_32, %c0_33, %c2, %c0_34] : memref<2x10x16x16xf32, #tpu.memory_space<vmem>>, vector<1x8x8x16xf32>
    %31 = vector.shape_cast %30 : vector<1x8x8x16xf32> to vector<8x8x16xf32>
    %32 = vector.extract_strided_slice %12 {offsets = [0, 2, 0], sizes = [1, 1, 16], strides = [1, 1, 1]} : vector<2x9x16xf32> to vector<1x1x16xf32>
    %33 = vector.shape_cast %32 : vector<1x1x16xf32> to vector<16xf32>
    %34 = vector.shape_cast %33 : vector<16xf32> to vector<1x1x16xf32>
    %35 = vector.broadcast %34 : vector<1x1x16xf32> to vector<8x8x16xf32>
    %36 = arith.mulf %31, %35 : vector<8x8x16xf32>
    %37 = arith.addf %29, %36 : vector<8x8x16xf32>
    %c0_35 = arith.constant 0 : index
    %c1_36 = arith.constant 1 : index
    %c0_37 = arith.constant 0 : index
    %c0_38 = arith.constant 0 : index
    %38 = vector.load %arg11[%c0_35, %c1_36, %c0_37, %c0_38] : memref<2x10x16x16xf32, #tpu.memory_space<vmem>>, vector<1x8x8x16xf32>
    %39 = vector.shape_cast %38 : vector<1x8x8x16xf32> to vector<8x8x16xf32>
    %40 = vector.extract_strided_slice %12 {offsets = [0, 3, 0], sizes = [1, 1, 16], strides = [1, 1, 1]} : vector<2x9x16xf32> to vector<1x1x16xf32>
    %41 = vector.shape_cast %40 : vector<1x1x16xf32> to vector<16xf32>
    %42 = vector.shape_cast %41 : vector<16xf32> to vector<1x1x16xf32>
    %43 = vector.broadcast %42 : vector<1x1x16xf32> to vector<8x8x16xf32>
    %44 = arith.mulf %39, %43 : vector<8x8x16xf32>
    %45 = arith.addf %37, %44 : vector<8x8x16xf32>
    %c0_39 = arith.constant 0 : index
    %c1_40 = arith.constant 1 : index
    %c1_41 = arith.constant 1 : index
    %c0_42 = arith.constant 0 : index
    %46 = vector.load %arg11[%c0_39, %c1_40, %c1_41, %c0_42] : memref<2x10x16x16xf32, #tpu.memory_space<vmem>>, vector<1x8x8x16xf32>
    %47 = vector.shape_cast %46 : vector<1x8x8x16xf32> to vector<8x8x16xf32>
    %48 = vector.extract_strided_slice %12 {offsets = [0, 4, 0], sizes = [1, 1, 16], strides = [1, 1, 1]} : vector<2x9x16xf32> to vector<1x1x16xf32>
    %49 = vector.shape_cast %48 : vector<1x1x16xf32> to vector<16xf32>
    %50 = vector.shape_cast %49 : vector<16xf32> to vector<1x1x16xf32>
    %51 = vector.broadcast %50 : vector<1x1x16xf32> to vector<8x8x16xf32>
    %52 = arith.mulf %47, %51 : vector<8x8x16xf32>
    %53 = arith.addf %45, %52 : vector<8x8x16xf32>
    %c0_43 = arith.constant 0 : index
    %c1_44 = arith.constant 1 : index
    %c2_45 = arith.constant 2 : index
    %c0_46 = arith.constant 0 : index
    %54 = vector.load %arg11[%c0_43, %c1_44, %c2_45, %c0_46] : memref<2x10x16x16xf32, #tpu.memory_space<vmem>>, vector<1x8x8x16xf32>
    %55 = vector.shape_cast %54 : vector<1x8x8x16xf32> to vector<8x8x16xf32>
    %56 = vector.extract_strided_slice %12 {offsets = [0, 5, 0], sizes = [1, 1, 16], strides = [1, 1, 1]} : vector<2x9x16xf32> to vector<1x1x16xf32>
    %57 = vector.shape_cast %56 : vector<1x1x16xf32> to vector<16xf32>
    %58 = vector.shape_cast %57 : vector<16xf32> to vector<1x1x16xf32>
    %59 = vector.broadcast %58 : vector<1x1x16xf32> to vector<8x8x16xf32>
    %60 = arith.mulf %55, %59 : vector<8x8x16xf32>
    %61 = arith.addf %53, %60 : vector<8x8x16xf32>
    %c0_47 = arith.constant 0 : index
    %c2_48 = arith.constant 2 : index
    %c0_49 = arith.constant 0 : index
    %c0_50 = arith.constant 0 : index
    %62 = vector.load %arg11[%c0_47, %c2_48, %c0_49, %c0_50] : memref<2x10x16x16xf32, #tpu.memory_space<vmem>>, vector<1x8x8x16xf32>
    %63 = vector.shape_cast %62 : vector<1x8x8x16xf32> to vector<8x8x16xf32>
    %64 = vector.extract_strided_slice %12 {offsets = [0, 6, 0], sizes = [1, 1, 16], strides = [1, 1, 1]} : vector<2x9x16xf32> to vector<1x1x16xf32>
    %65 = vector.shape_cast %64 : vector<1x1x16xf32> to vector<16xf32>
    %66 = vector.shape_cast %65 : vector<16xf32> to vector<1x1x16xf32>
    %67 = vector.broadcast %66 : vector<1x1x16xf32> to vector<8x8x16xf32>
    %68 = arith.mulf %63, %67 : vector<8x8x16xf32>
    %69 = arith.addf %61, %68 : vector<8x8x16xf32>
    %c0_51 = arith.constant 0 : index
    %c2_52 = arith.constant 2 : index
    %c1_53 = arith.constant 1 : index
    %c0_54 = arith.constant 0 : index
    %70 = vector.load %arg11[%c0_51, %c2_52, %c1_53, %c0_54] : memref<2x10x16x16xf32, #tpu.memory_space<vmem>>, vector<1x8x8x16xf32>
    %71 = vector.shape_cast %70 : vector<1x8x8x16xf32> to vector<8x8x16xf32>
    %72 = vector.extract_strided_slice %12 {offsets = [0, 7, 0], sizes = [1, 1, 16], strides = [1, 1, 1]} : vector<2x9x16xf32> to vector<1x1x16xf32>
    %73 = vector.shape_cast %72 : vector<1x1x16xf32> to vector<16xf32>
    %74 = vector.shape_cast %73 : vector<16xf32> to vector<1x1x16xf32>
    %75 = vector.broadcast %74 : vector<1x1x16xf32> to vector<8x8x16xf32>
    %76 = arith.mulf %71, %75 : vector<8x8x16xf32>
    %77 = arith.addf %69, %76 : vector<8x8x16xf32>
    %c0_55 = arith.constant 0 : index
    %c2_56 = arith.constant 2 : index
    %c2_57 = arith.constant 2 : index
    %c0_58 = arith.constant 0 : index
    %78 = vector.load %arg11[%c0_55, %c2_56, %c2_57, %c0_58] : memref<2x10x16x16xf32, #tpu.memory_space<vmem>>, vector<1x8x8x16xf32>
    %79 = vector.shape_cast %78 : vector<1x8x8x16xf32> to vector<8x8x16xf32>
    %80 = vector.extract_strided_slice %12 {offsets = [0, 8, 0], sizes = [1, 1, 16], strides = [1, 1, 1]} : vector<2x9x16xf32> to vector<1x1x16xf32>
    %81 = vector.shape_cast %80 : vector<1x1x16xf32> to vector<16xf32>
    %82 = vector.shape_cast %81 : vector<16xf32> to vector<1x1x16xf32>
    %83 = vector.broadcast %82 : vector<1x1x16xf32> to vector<8x8x16xf32>
    %84 = arith.mulf %79, %83 : vector<8x8x16xf32>
    %85 = arith.addf %77, %84 : vector<8x8x16xf32>
    %c0_59 = arith.constant 0 : index
    %c0_60 = arith.constant 0 : index
    %86 = vector.load %arg5[%c0_59, %c0_60] : memref<2x16xf32, #tpu.memory_space<vmem>>, vector<1x16xf32>
    %87 = vector.shape_cast %86 : vector<1x16xf32> to vector<16xf32>
    %88 = vector.shape_cast %87 : vector<16xf32> to vector<1x1x16xf32>
    %89 = vector.broadcast %88 : vector<1x1x16xf32> to vector<8x8x16xf32>
    %90 = arith.mulf %85, %89 : vector<8x8x16xf32>
    %c0_61 = arith.constant 0 : index
    %c0_62 = arith.constant 0 : index
    %91 = vector.load %arg6[%c0_61, %c0_62] : memref<2x16xf32, #tpu.memory_space<vmem>>, vector<1x16xf32>
    %92 = vector.shape_cast %91 : vector<1x16xf32> to vector<16xf32>
    %93 = vector.shape_cast %92 : vector<16xf32> to vector<1x1x16xf32>
    %94 = vector.broadcast %93 : vector<1x1x16xf32> to vector<8x8x16xf32>
    %95 = arith.addf %90, %94 : vector<8x8x16xf32>
    %cst_63 = arith.constant 0.000000e+00 : f32
    %cst_64 = arith.constant 6.000000e+00 : f32
    %96 = vector.broadcast %cst_63 : f32 to vector<8x8x16xf32>
    %97 = arith.maximumf %96, %95 : vector<8x8x16xf32>
    %98 = vector.broadcast %cst_64 : f32 to vector<8x8x16xf32>
    %99 = arith.minimumf %98, %97 : vector<8x8x16xf32>
    %100 = vector.shape_cast %99 : vector<8x8x16xf32> to vector<64x16xf32>
    %101 = arith.truncf %100 : vector<64x16xf32> to vector<64x16xbf16>
    %cst_65 = arith.constant 0.000000e+00 : f32
    %102 = vector.broadcast %cst_65 : f32 to vector<8x8x16xf32>
    %c1_66 = arith.constant 1 : index
    %c0_67 = arith.constant 0 : index
    %c0_68 = arith.constant 0 : index
    %c0_69 = arith.constant 0 : index
    %103 = vector.load %arg11[%c1_66, %c0_67, %c0_68, %c0_69] : memref<2x10x16x16xf32, #tpu.memory_space<vmem>>, vector<1x8x8x16xf32>
    %104 = vector.shape_cast %103 : vector<1x8x8x16xf32> to vector<8x8x16xf32>
    %105 = vector.extract_strided_slice %12 {offsets = [1, 0, 0], sizes = [1, 1, 16], strides = [1, 1, 1]} : vector<2x9x16xf32> to vector<1x1x16xf32>
    %106 = vector.shape_cast %105 : vector<1x1x16xf32> to vector<16xf32>
    %107 = vector.shape_cast %106 : vector<16xf32> to vector<1x1x16xf32>
    %108 = vector.broadcast %107 : vector<1x1x16xf32> to vector<8x8x16xf32>
    %109 = arith.mulf %104, %108 : vector<8x8x16xf32>
    %110 = arith.addf %102, %109 : vector<8x8x16xf32>
    %c1_70 = arith.constant 1 : index
    %c0_71 = arith.constant 0 : index
    %c1_72 = arith.constant 1 : index
    %c0_73 = arith.constant 0 : index
    %111 = vector.load %arg11[%c1_70, %c0_71, %c1_72, %c0_73] : memref<2x10x16x16xf32, #tpu.memory_space<vmem>>, vector<1x8x8x16xf32>
    %112 = vector.shape_cast %111 : vector<1x8x8x16xf32> to vector<8x8x16xf32>
    %113 = vector.extract_strided_slice %12 {offsets = [1, 1, 0], sizes = [1, 1, 16], strides = [1, 1, 1]} : vector<2x9x16xf32> to vector<1x1x16xf32>
    %114 = vector.shape_cast %113 : vector<1x1x16xf32> to vector<16xf32>
    %115 = vector.shape_cast %114 : vector<16xf32> to vector<1x1x16xf32>
    %116 = vector.broadcast %115 : vector<1x1x16xf32> to vector<8x8x16xf32>
    %117 = arith.mulf %112, %116 : vector<8x8x16xf32>
    %118 = arith.addf %110, %117 : vector<8x8x16xf32>
    %c1_74 = arith.constant 1 : index
    %c0_75 = arith.constant 0 : index
    %c2_76 = arith.constant 2 : index
    %c0_77 = arith.constant 0 : index
    %119 = vector.load %arg11[%c1_74, %c0_75, %c2_76, %c0_77] : memref<2x10x16x16xf32, #tpu.memory_space<vmem>>, vector<1x8x8x16xf32>
    %120 = vector.shape_cast %119 : vector<1x8x8x16xf32> to vector<8x8x16xf32>
    %121 = vector.extract_strided_slice %12 {offsets = [1, 2, 0], sizes = [1, 1, 16], strides = [1, 1, 1]} : vector<2x9x16xf32> to vector<1x1x16xf32>
    %122 = vector.shape_cast %121 : vector<1x1x16xf32> to vector<16xf32>
    %123 = vector.shape_cast %122 : vector<16xf32> to vector<1x1x16xf32>
    %124 = vector.broadcast %123 : vector<1x1x16xf32> to vector<8x8x16xf32>
    %125 = arith.mulf %120, %124 : vector<8x8x16xf32>
    %126 = arith.addf %118, %125 : vector<8x8x16xf32>
    %c1_78 = arith.constant 1 : index
    %c1_79 = arith.constant 1 : index
    %c0_80 = arith.constant 0 : index
    %c0_81 = arith.constant 0 : index
    %127 = vector.load %arg11[%c1_78, %c1_79, %c0_80, %c0_81] : memref<2x10x16x16xf32, #tpu.memory_space<vmem>>, vector<1x8x8x16xf32>
    %128 = vector.shape_cast %127 : vector<1x8x8x16xf32> to vector<8x8x16xf32>
    %129 = vector.extract_strided_slice %12 {offsets = [1, 3, 0], sizes = [1, 1, 16], strides = [1, 1, 1]} : vector<2x9x16xf32> to vector<1x1x16xf32>
    %130 = vector.shape_cast %129 : vector<1x1x16xf32> to vector<16xf32>
    %131 = vector.shape_cast %130 : vector<16xf32> to vector<1x1x16xf32>
    %132 = vector.broadcast %131 : vector<1x1x16xf32> to vector<8x8x16xf32>
    %133 = arith.mulf %128, %132 : vector<8x8x16xf32>
    %134 = arith.addf %126, %133 : vector<8x8x16xf32>
    %c1_82 = arith.constant 1 : index
    %c1_83 = arith.constant 1 : index
    %c1_84 = arith.constant 1 : index
    %c0_85 = arith.constant 0 : index
    %135 = vector.load %arg11[%c1_82, %c1_83, %c1_84, %c0_85] : memref<2x10x16x16xf32, #tpu.memory_space<vmem>>, vector<1x8x8x16xf32>
    %136 = vector.shape_cast %135 : vector<1x8x8x16xf32> to vector<8x8x16xf32>
    %137 = vector.extract_strided_slice %12 {offsets = [1, 4, 0], sizes = [1, 1, 16], strides = [1, 1, 1]} : vector<2x9x16xf32> to vector<1x1x16xf32>
    %138 = vector.shape_cast %137 : vector<1x1x16xf32> to vector<16xf32>
    %139 = vector.shape_cast %138 : vector<16xf32> to vector<1x1x16xf32>
    %140 = vector.broadcast %139 : vector<1x1x16xf32> to vector<8x8x16xf32>
    %141 = arith.mulf %136, %140 : vector<8x8x16xf32>
    %142 = arith.addf %134, %141 : vector<8x8x16xf32>
    %c1_86 = arith.constant 1 : index
    %c1_87 = arith.constant 1 : index
    %c2_88 = arith.constant 2 : index
    %c0_89 = arith.constant 0 : index
    %143 = vector.load %arg11[%c1_86, %c1_87, %c2_88, %c0_89] : memref<2x10x16x16xf32, #tpu.memory_space<vmem>>, vector<1x8x8x16xf32>
    %144 = vector.shape_cast %143 : vector<1x8x8x16xf32> to vector<8x8x16xf32>
    %145 = vector.extract_strided_slice %12 {offsets = [1, 5, 0], sizes = [1, 1, 16], strides = [1, 1, 1]} : vector<2x9x16xf32> to vector<1x1x16xf32>
    %146 = vector.shape_cast %145 : vector<1x1x16xf32> to vector<16xf32>
    %147 = vector.shape_cast %146 : vector<16xf32> to vector<1x1x16xf32>
    %148 = vector.broadcast %147 : vector<1x1x16xf32> to vector<8x8x16xf32>
    %149 = arith.mulf %144, %148 : vector<8x8x16xf32>
    %150 = arith.addf %142, %149 : vector<8x8x16xf32>
    %c1_90 = arith.constant 1 : index
    %c2_91 = arith.constant 2 : index
    %c0_92 = arith.constant 0 : index
    %c0_93 = arith.constant 0 : index
    %151 = vector.load %arg11[%c1_90, %c2_91, %c0_92, %c0_93] : memref<2x10x16x16xf32, #tpu.memory_space<vmem>>, vector<1x8x8x16xf32>
    %152 = vector.shape_cast %151 : vector<1x8x8x16xf32> to vector<8x8x16xf32>
    %153 = vector.extract_strided_slice %12 {offsets = [1, 6, 0], sizes = [1, 1, 16], strides = [1, 1, 1]} : vector<2x9x16xf32> to vector<1x1x16xf32>
    %154 = vector.shape_cast %153 : vector<1x1x16xf32> to vector<16xf32>
    %155 = vector.shape_cast %154 : vector<16xf32> to vector<1x1x16xf32>
    %156 = vector.broadcast %155 : vector<1x1x16xf32> to vector<8x8x16xf32>
    %157 = arith.mulf %152, %156 : vector<8x8x16xf32>
    %158 = arith.addf %150, %157 : vector<8x8x16xf32>
    %c1_94 = arith.constant 1 : index
    %c2_95 = arith.constant 2 : index
    %c1_96 = arith.constant 1 : index
    %c0_97 = arith.constant 0 : index
    %159 = vector.load %arg11[%c1_94, %c2_95, %c1_96, %c0_97] : memref<2x10x16x16xf32, #tpu.memory_space<vmem>>, vector<1x8x8x16xf32>
    %160 = vector.shape_cast %159 : vector<1x8x8x16xf32> to vector<8x8x16xf32>
    %161 = vector.extract_strided_slice %12 {offsets = [1, 7, 0], sizes = [1, 1, 16], strides = [1, 1, 1]} : vector<2x9x16xf32> to vector<1x1x16xf32>
    %162 = vector.shape_cast %161 : vector<1x1x16xf32> to vector<16xf32>
    %163 = vector.shape_cast %162 : vector<16xf32> to vector<1x1x16xf32>
    %164 = vector.broadcast %163 : vector<1x1x16xf32> to vector<8x8x16xf32>
    %165 = arith.mulf %160, %164 : vector<8x8x16xf32>
    %166 = arith.addf %158, %165 : vector<8x8x16xf32>
    %c1_98 = arith.constant 1 : index
    %c2_99 = arith.constant 2 : index
    %c2_100 = arith.constant 2 : index
    %c0_101 = arith.constant 0 : index
    %167 = vector.load %arg11[%c1_98, %c2_99, %c2_100, %c0_101] : memref<2x10x16x16xf32, #tpu.memory_space<vmem>>, vector<1x8x8x16xf32>
    %168 = vector.shape_cast %167 : vector<1x8x8x16xf32> to vector<8x8x16xf32>
    %169 = vector.extract_strided_slice %12 {offsets = [1, 8, 0], sizes = [1, 1, 16], strides = [1, 1, 1]} : vector<2x9x16xf32> to vector<1x1x16xf32>
    %170 = vector.shape_cast %169 : vector<1x1x16xf32> to vector<16xf32>
    %171 = vector.shape_cast %170 : vector<16xf32> to vector<1x1x16xf32>
    %172 = vector.broadcast %171 : vector<1x1x16xf32> to vector<8x8x16xf32>
    %173 = arith.mulf %168, %172 : vector<8x8x16xf32>
    %174 = arith.addf %166, %173 : vector<8x8x16xf32>
    %c1_102 = arith.constant 1 : index
    %c0_103 = arith.constant 0 : index
    %175 = vector.load %arg5[%c1_102, %c0_103] : memref<2x16xf32, #tpu.memory_space<vmem>>, vector<1x16xf32>
    %176 = vector.shape_cast %175 : vector<1x16xf32> to vector<16xf32>
    %177 = vector.shape_cast %176 : vector<16xf32> to vector<1x1x16xf32>
    %178 = vector.broadcast %177 : vector<1x1x16xf32> to vector<8x8x16xf32>
    %179 = arith.mulf %174, %178 : vector<8x8x16xf32>
    %c1_104 = arith.constant 1 : index
    %c0_105 = arith.constant 0 : index
    %180 = vector.load %arg6[%c1_104, %c0_105] : memref<2x16xf32, #tpu.memory_space<vmem>>, vector<1x16xf32>
    %181 = vector.shape_cast %180 : vector<1x16xf32> to vector<16xf32>
    %182 = vector.shape_cast %181 : vector<16xf32> to vector<1x1x16xf32>
    %183 = vector.broadcast %182 : vector<1x1x16xf32> to vector<8x8x16xf32>
    %184 = arith.addf %179, %183 : vector<8x8x16xf32>
    %cst_106 = arith.constant 0.000000e+00 : f32
    %cst_107 = arith.constant 6.000000e+00 : f32
    %185 = vector.broadcast %cst_106 : f32 to vector<8x8x16xf32>
    %186 = arith.maximumf %185, %184 : vector<8x8x16xf32>
    %187 = vector.broadcast %cst_107 : f32 to vector<8x8x16xf32>
    %188 = arith.minimumf %187, %186 : vector<8x8x16xf32>
    %189 = vector.shape_cast %188 : vector<8x8x16xf32> to vector<64x16xf32>
    %190 = arith.truncf %189 : vector<64x16xf32> to vector<64x16xbf16>
    %c0_108 = arith.constant 0 : index
    %c0_109 = arith.constant 0 : index
    %c0_110 = arith.constant 0 : index
    %191 = vector.load %arg7[%c0_108, %c0_109, %c0_110] : memref<2x16x16xbf16, #tpu.memory_space<vmem>>, vector<1x16x16xbf16>
    %192 = vector.shape_cast %191 : vector<1x16x16xbf16> to vector<16x16xbf16>
    %cst_111 = arith.constant dense<0.000000e+00> : vector<64x16xf32>
    %193 = tpu.matmul %101, %192, %cst_111 {dimension_numbers = #tpu.dot_dimension_numbers<[1], [0], [0], [1], [0, 0, 1, 1], [], []>} : vector<64x16xbf16>, vector<16x16xbf16>, vector<64x16xf32> -> vector<64x16xf32>
    %c1_112 = arith.constant 1 : index
    %c0_113 = arith.constant 0 : index
    %c0_114 = arith.constant 0 : index
    %194 = vector.load %arg7[%c1_112, %c0_113, %c0_114] : memref<2x16x16xbf16, #tpu.memory_space<vmem>>, vector<1x16x16xbf16>
    %195 = vector.shape_cast %194 : vector<1x16x16xbf16> to vector<16x16xbf16>
    %cst_115 = arith.constant dense<0.000000e+00> : vector<64x16xf32>
    %196 = tpu.matmul %190, %195, %cst_115 {dimension_numbers = #tpu.dot_dimension_numbers<[1], [0], [0], [1], [0, 0, 1, 1], [], []>} : vector<64x16xbf16>, vector<16x16xbf16>, vector<64x16xf32> -> vector<64x16xf32>
    %197 = arith.addf %193, %196 : vector<64x16xf32>
    %c0_116 = arith.constant 0 : index
    %c0_117 = arith.constant 0 : index
    %198 = vector.load %arg8[%c0_116, %c0_117] : memref<1x16xf32, #tpu.memory_space<vmem>>, vector<1x16xf32>
    %199 = vector.broadcast %198 : vector<1x16xf32> to vector<64x16xf32>
    %200 = arith.mulf %197, %199 : vector<64x16xf32>
    %c0_118 = arith.constant 0 : index
    %c0_119 = arith.constant 0 : index
    %201 = vector.load %arg9[%c0_118, %c0_119] : memref<1x16xf32, #tpu.memory_space<vmem>>, vector<1x16xf32>
    %202 = vector.broadcast %201 : vector<1x16xf32> to vector<64x16xf32>
    %203 = arith.addf %200, %202 : vector<64x16xf32>
    %cst_120 = arith.constant 0.000000e+00 : f32
    %cst_121 = arith.constant 6.000000e+00 : f32
    %204 = vector.broadcast %cst_120 : f32 to vector<64x16xf32>
    %205 = arith.maximumf %204, %203 : vector<64x16xf32>
    %206 = vector.broadcast %cst_121 : f32 to vector<64x16xf32>
    %207 = arith.minimumf %206, %205 : vector<64x16xf32>
    %208 = vector.shape_cast %207 : vector<64x16xf32> to vector<1x1x8x8x16xf32>
    %c0_122 = arith.constant 0 : index
    %c0_123 = arith.constant 0 : index
    %c0_124 = arith.constant 0 : index
    %c0_125 = arith.constant 0 : index
    %c0_126 = arith.constant 0 : index
    %209 = vector.load %arg10[%c0_122, %c0_123, %c0_124, %c0_125, %c0_126] : memref<1x1x8x8x16xf32, #tpu.memory_space<vmem>>, vector<1x1x8x8x16xf32>
    tpu.vector_store %arg10[%c0_122, %c0_123, %c0_124, %c0_125, %c0_126], %208 {strides = array<i32>} : memref<1x1x8x8x16xf32, #tpu.memory_space<vmem>>, vector<1x1x8x8x16xf32>,
    return
  }
  func.func @transform_0(%arg0: i32, %arg1: i32) -> (i32, i32, i32, i32, i32) {
    %c0_i32 = arith.constant 0 : i32
    %c0_i32_0 = arith.constant 0 : i32
    %c0_i32_1 = arith.constant 0 : i32
    %c0_i32_2 = arith.constant 0 : i32
    return %arg0, %arg1, %c0_i32, %c0_i32_0, %c0_i32_1 : i32, i32, i32, i32, i32
  }
  func.func @transform_1(%arg0: i32, %arg1: i32) -> (i32, i32, i32, i32, i32) {
    %c1_i32 = arith.constant 1 : i32
    %0 = arith.addi %arg0, %c1_i32 : i32
    %c0_i32 = arith.constant 0 : i32
    %c0_i32_0 = arith.constant 0 : i32
    %c0_i32_1 = arith.constant 0 : i32
    %c0_i32_2 = arith.constant 0 : i32
    return %0, %arg1, %c0_i32, %c0_i32_0, %c0_i32_1 : i32, i32, i32, i32, i32
  }
  func.func @transform_2(%arg0: i32, %arg1: i32) -> (i32, i32, i32) {
    %c0_i32 = arith.constant 0 : i32
    %c0_i32_0 = arith.constant 0 : i32
    %c0_i32_1 = arith.constant 0 : i32
    %c0_i32_2 = arith.constant 0 : i32
    return %c0_i32, %c0_i32_0, %c0_i32_1 : i32, i32, i32
  }
  func.func @transform_3(%arg0: i32, %arg1: i32) -> (i32, i32) {
    %c0_i32 = arith.constant 0 : i32
    %c0_i32_0 = arith.constant 0 : i32
    %c0_i32_1 = arith.constant 0 : i32
    return %c0_i32, %c0_i32_0 : i32, i32
  }
  func.func @transform_4(%arg0: i32, %arg1: i32) -> (i32, i32) {
    %c0_i32 = arith.constant 0 : i32
    %c0_i32_0 = arith.constant 0 : i32
    %c0_i32_1 = arith.constant 0 : i32
    return %c0_i32, %c0_i32_0 : i32, i32
  }
  func.func @transform_5(%arg0: i32, %arg1: i32) -> (i32, i32, i32) {
    %c0_i32 = arith.constant 0 : i32
    %c0_i32_0 = arith.constant 0 : i32
    %c0_i32_1 = arith.constant 0 : i32
    %c0_i32_2 = arith.constant 0 : i32
    return %c0_i32, %c0_i32_0, %c0_i32_1 : i32, i32, i32
  }
  func.func @transform_6(%arg0: i32, %arg1: i32) -> (i32, i32) {
    %c0_i32 = arith.constant 0 : i32
    %c0_i32_0 = arith.constant 0 : i32
    %c0_i32_1 = arith.constant 0 : i32
    return %c0_i32, %c0_i32_0 : i32, i32
  }
  func.func @transform_7(%arg0: i32, %arg1: i32) -> (i32, i32) {
    %c0_i32 = arith.constant 0 : i32
    %c0_i32_0 = arith.constant 0 : i32
    %c0_i32_1 = arith.constant 0 : i32
    return %c0_i32, %c0_i32_0 : i32, i32
  }
  func.func @transform_8(%arg0: i32, %arg1: i32) -> (i32, i32, i32, i32, i32) {
    %c0_i32 = arith.constant 0 : i32
    %c0_i32_0 = arith.constant 0 : i32
    %c0_i32_1 = arith.constant 0 : i32
    %c0_i32_2 = arith.constant 0 : i32
    return %arg0, %arg1, %c0_i32, %c0_i32_0, %c0_i32_1 : i32, i32, i32, i32, i32
  }
}

</mosaic_0001>

<llo_original>
// kernel: tpu_custom_call.1
$region0: #{tpu_custom_call.1}
  #allocation0 [shape = 'u32[]', space=smem, size = 0x4, offset = 0x4, fixed_abs, tag = 'smem constant byte address 0x4 - core index']
  #allocation1 [shape = 'u32[72,128]{1,0:T(1,128)}', space=vmem, size = 0x9000, scoped, tag = 'internal scratch']
  #allocation2 [shape = 'f32[2,10,16,16]{3,2,1,0:T(8,128)}', space=vmem, size = 0x28000, scoped, tag = 'scratch operand']
  %s0 = inlined_call_operand.hbm [shape: f32[3,2,8,8,16], index: 0, kind: input, shape index: {}]
  %s1 = inlined_call_operand.hbm [shape: f32[3,2,8,8,16], index: 1, kind: input, shape index: {}]
  %s2 = inlined_call_operand.vmem [shape: f32[2,9,16], index: 2, kind: input, shape index: {}]
  %s3 = inlined_call_operand.vmem [shape: f32[2,16], index: 3, kind: input, shape index: {}]
  %s4 = inlined_call_operand.vmem [shape: f32[2,16], index: 4, kind: input, shape index: {}]
  %s5 = inlined_call_operand.vmem [shape: bf16[2,16,16], index: 5, kind: input, shape index: {}]
  %s6 = inlined_call_operand.vmem [shape: f32[1,16], index: 6, kind: input, shape index: {}]
  %s7 = inlined_call_operand.vmem [shape: f32[1,16], index: 7, kind: input, shape index: {}]
  %s8 = inlined_call_operand.hbm [shape: f32[2,2,8,8,16], index: 8, kind: output, shape index: {}]
  %s9 = sld [smem:[#allocation0]]
  $region73: #{tpu_custom_call.1} parent=0
    _
  %s11 = ssub.s32 1, %s9
  %s12 = scalar_select 0, %s11, %s9
  $region1: #{tpu_custom_call.1} parent=0
    #allocation3 [shape = 'u8[65536]{0}', space=vmem, size = 0x10000, scoped, tag = 'input window, operand 0']
    #allocation4 [shape = 's32[2]{0}', space=sflag, size = 0x8, scoped, tag = 'scoped memory for tpu_custom_call.1']
    #allocation5 [shape = 's32[2]{0}', space=sflag, size = 0x8, scoped, tag = 'scoped memory for tpu_custom_call.1']
    #allocation6 [shape = 'u8[65536]{0}', space=vmem, size = 0x10000, scoped, tag = 'input window, operand 1']
    #allocation7 [shape = 's32[2]{0}', space=sflag, size = 0x8, scoped, tag = 'scoped memory for tpu_custom_call.1']
    #allocation8 [shape = 'u8[65536]{0}', space=vmem, size = 0x10000, scoped, tag = 'output window, operand 0']
    %13 = vsyncpa [#allocation4], 0
    %s14 = scalar_lea.sflag [#allocation4], 1
    %15 = vsyncpa %s14, 0
    %16 = vsyncpa [#allocation7], 0
    %s17 = scalar_lea.sflag [#allocation7], 1
    %18 = vsyncpa %s17, 0
    %19 = vsyncpa [#allocation5], 0
    %s20 = scalar_lea.sflag [#allocation5], 1
    %21 = vsyncpa %s20, 0
    loop: start=0, step=1, limit=6
    $region2: #{tpu_custom_call.1} parent=1 // loop_pre_header
      _
    $region3: #{tpu_custom_call.1} parent=1 // loop_header
      %s23 = sphi 0, %s27
      %p24 = scmp.ge.s32.totalorder %s23, 6
      %s30 = sphi 0, %s42
      %s31 = sphi 0, %s38
      %s32 = sphi 0, %s30
      %s33 = sphi 0, %s31
      %s34 = sphi 0, %s32
      %s35 = sphi 0, %s33
      %s47 = sphi 0, %s49
      %s50 = sphi 0, %s47
      %s51 = sphi 0, %s50
      %s67 = sphi 0, %s51
      %s77 = sphi 0, %s79
      %s80 = sphi 0, %s77
      %s81 = sphi 0, %s80
      %s97 = sphi 0, %s81
      %s101 = sphi 0, %s101
      %s103 = sphi 0, %s101
      %s104 = sphi 0, %s103
      %s118 = sphi 0, %s104
      %s122 = sphi 0, %s122
      %s124 = sphi 0, %s122
      %s125 = sphi 0, %s124
      %s139 = sphi 0, %s125
      %s143 = sphi 0, %s143
      %s145 = sphi 0, %s143
      %s146 = sphi 0, %s145
      %s160 = sphi 0, %s146
      %s164 = sphi 0, %s164
      %s166 = sphi 0, %s164
      %s167 = sphi 0, %s166
      %s181 = sphi 0, %s167
      %s185 = sphi 0, %s185
      %s187 = sphi 0, %s185
      %s188 = sphi 0, %s187
      %s202 = sphi 0, %s188
      %s206 = sphi 0, %s206
      %s208 = sphi 0, %s206
      %s209 = sphi 0, %s208
      %s223 = sphi 0, %s209
      %s231 = sphi 0, %s233
      %s234 = sphi 0, %s231
      %s235 = sphi 0, %s234
      %s251 = sphi 0, %s235
    $region4: #{tpu_custom_call.1} parent=1 // loop_header_branch
      %26 = sbr.rel (%p24) target = $region8
    $region5: #{tpu_custom_call.1} parent=1 // loop_body
      %s28 = ssub.s32 %s23, 1
      %s29 = ssub.s32 %s23, 2
      %s36 = sadd.s32 1, %s31
      %p37 = scmp.ge.s32.totalorder %s36, 2
      %s38 = scalar_select %p37, 0, %s36
      %s39 = sadd.s32 1, %s30
      %s40 = scalar_select %p37, %s39, %s30
      %p41 = scmp.ge.s32.totalorder %s40, 2
      %s42 = scalar_select %p41, 0, %s40
      %s43 = ssub.s32 %s30, %s42
      %s44 = ssub.s32 %s31, %s38
      %s45 = sor.u32 %s43, %s44
      %p46 = scmp.eq.s32.totalorder %s45, 0
      %s48 = sadd.s32 %s47, 1
      %s49 = scalar_select %p46, %s47, %s48
      %p52 = pneg %p46
      %p53 = scmp.eq.s32.totalorder %s23, 3
      %p54 = por %p52, %p53
      %p55 = scmp.ne.s32.totalorder %s47, %s50
      %p56 = scmp.eq.s32.totalorder %s23, 0
      %p57 = por %p55, %p56
      %p58 = scmp.ne.s32.totalorder %s47, %s50
      %p59 = scmp.eq.s32.totalorder %s28, 3
      %p60 = por %p58, %p59
      %p61 = scmp.ne.s32.totalorder %s50, %s51
      %p62 = scmp.eq.s32.totalorder %s28, 0
      %p63 = por %p61, %p62
      %p64 = scmp.ne.s32.totalorder %s50, %s51
      %p65 = scmp.eq.s32.totalorder %s29, 3
      %p66 = por %p64, %p65
      %p68 = scmp.ne.s32.totalorder %s51, %s67
      %p69 = scmp.eq.s32.totalorder %s29, 0
      %p70 = por %p68, %p69
      %s71 = sadd.s32 %s30, 1
      %s72 = sadd.s32 %s42, 1
      %s73 = ssub.s32 %s71, %s72
      %s74 = ssub.s32 %s31, %s38
      %s75 = sor.u32 %s73, %s74
      %p76 = scmp.eq.s32.totalorder %s75, 0
      %s78 = sadd.s32 %s77, 1
      %s79 = scalar_select %p76, %s77, %s78
      %p82 = pneg %p76
      %p83 = scmp.eq.s32.totalorder %s23, 3
      %p84 = por %p82, %p83
      %p85 = scmp.ne.s32.totalorder %s77, %s80
      %p86 = scmp.eq.s32.totalorder %s23, 0
      %p87 = por %p85, %p86
      %p88 = scmp.ne.s32.totalorder %s77, %s80
      %p89 = scmp.eq.s32.totalorder %s28, 3
      %p90 = por %p88, %p89
      %p91 = scmp.ne.s32.totalorder %s80, %s81
      %p92 = scmp.eq.s32.totalorder %s28, 0
      %p93 = por %p91, %p92
      %p94 = scmp.ne.s32.totalorder %s80, %s81
      %p95 = scmp.eq.s32.totalorder %s29, 3
      %p96 = por %p94, %p95
      %p98 = scmp.ne.s32.totalorder %s81, %s97
      %p99 = scmp.eq.s32.totalorder %s29, 0
      %p100 = por %p98, %p99
      %s102 = sadd.s32 %s101, 1
      %p105 = scmp.eq.s32.totalorder %s23, 3
      %p106 = scmp.ne.s32.totalorder %s101, %s103
      %p107 = scmp.eq.s32.totalorder %s23, 0
      %p108 = por %p106, %p107
      %p109 = scmp.ne.s32.totalorder %s101, %s103
      %p110 = scmp.eq.s32.totalorder %s28, 3
      %p111 = por %p109, %p110
      %p112 = scmp.ne.s32.totalorder %s103, %s104
      %p113 = scmp.eq.s32.totalorder %s28, 0
      %p114 = por %p112, %p113
      %p115 = scmp.ne.s32.totalorder %s103, %s104
      %p116 = scmp.eq.s32.totalorder %s29, 3
      %p117 = por %p115, %p116
      %p119 = scmp.ne.s32.totalorder %s104, %s118
      %p120 = scmp.eq.s32.totalorder %s29, 0
      %p121 = por %p119, %p120
      %s123 = sadd.s32 %s122, 1
      %p126 = scmp.eq.s32.totalorder %s23, 3
      %p127 = scmp.ne.s32.totalorder %s122, %s124
      %p128 = scmp.eq.s32.totalorder %s23, 0
      %p129 = por %p127, %p128
      %p130 = scmp.ne.s32.totalorder %s122, %s124
      %p131 = scmp.eq.s32.totalorder %s28, 3
      %p132 = por %p130, %p131
      %p133 = scmp.ne.s32.totalorder %s124, %s125
      %p134 = scmp.eq.s32.totalorder %s28, 0
      %p135 = por %p133, %p134
      %p136 = scmp.ne.s32.totalorder %s124, %s125
      %p137 = scmp.eq.s32.totalorder %s29, 3
      %p138 = por %p136, %p137
      %p140 = scmp.ne.s32.totalorder %s125, %s139
      %p141 = scmp.eq.s32.totalorder %s29, 0
      %p142 = por %p140, %p141
      %s144 = sadd.s32 %s143, 1
      %p147 = scmp.eq.s32.totalorder %s23, 3
      %p148 = scmp.ne.s32.totalorder %s143, %s145
      %p149 = scmp.eq.s32.totalorder %s23, 0
      %p150 = por %p148, %p149
      %p151 = scmp.ne.s32.totalorder %s143, %s145
      %p152 = scmp.eq.s32.totalorder %s28, 3
      %p153 = por %p151, %p152
      %p154 = scmp.ne.s32.totalorder %s145, %s146
      %p155 = scmp.eq.s32.totalorder %s28, 0
      %p156 = por %p154, %p155
      %p157 = scmp.ne.s32.totalorder %s145, %s146
      %p158 = scmp.eq.s32.totalorder %s29, 3
      %p159 = por %p157, %p158
      %p161 = scmp.ne.s32.totalorder %s146, %s160
      %p162 = scmp.eq.s32.totalorder %s29, 0
      %p163 = por %p161, %p162
      %s165 = sadd.s32 %s164, 1
      %p168 = scmp.eq.s32.totalorder %s23, 3
      %p169 = scmp.ne.s32.totalorder %s164, %s166
      %p170 = scmp.eq.s32.totalorder %s23, 0
      %p171 = por %p169, %p170
      %p172 = scmp.ne.s32.totalorder %s164, %s166
      %p173 = scmp.eq.s32.totalorder %s28, 3
      %p174 = por %p172, %p173
      %p175 = scmp.ne.s32.totalorder %s166, %s167
      %p176 = scmp.eq.s32.totalorder %s28, 0
      %p177 = por %p175, %p176
      %p178 = scmp.ne.s32.totalorder %s166, %s167
      %p179 = scmp.eq.s32.totalorder %s29, 3
      %p180 = por %p178, %p179
      %p182 = scmp.ne.s32.totalorder %s167, %s181
      %p183 = scmp.eq.s32.totalorder %s29, 0
      %p184 = por %p182, %p183
      %s186 = sadd.s32 %s185, 1
      %p189 = scmp.eq.s32.totalorder %s23, 3
      %p190 = scmp.ne.s32.totalorder %s185, %s187
      %p191 = scmp.eq.s32.totalorder %s23, 0
      %p192 = por %p190, %p191
      %p193 = scmp.ne.s32.totalorder %s185, %s187
      %p194 = scmp.eq.s32.totalorder %s28, 3
      %p195 = por %p193, %p194
      %p196 = scmp.ne.s32.totalorder %s187, %s188
      %p197 = scmp.eq.s32.totalorder %s28, 0
      %p198 = por %p196, %p197
      %p199 = scmp.ne.s32.totalorder %s187, %s188
      %p200 = scmp.eq.s32.totalorder %s29, 3
      %p201 = por %p199, %p200
      %p203 = scmp.ne.s32.totalorder %s188, %s202
      %p204 = scmp.eq.s32.totalorder %s29, 0
      %p205 = por %p203, %p204
      %s207 = sadd.s32 %s206, 1
      %p210 = scmp.eq.s32.totalorder %s23, 3
      %p211 = scmp.ne.s32.totalorder %s206, %s208
      %p212 = scmp.eq.s32.totalorder %s23, 0
      %p213 = por %p211, %p212
      %p214 = scmp.ne.s32.totalorder %s206, %s208
      %p215 = scmp.eq.s32.totalorder %s28, 3
      %p216 = por %p214, %p215
      %p217 = scmp.ne.s32.totalorder %s208, %s209
      %p218 = scmp.eq.s32.totalorder %s28, 0
      %p219 = por %p217, %p218
      %p220 = scmp.ne.s32.totalorder %s208, %s209
      %p221 = scmp.eq.s32.totalorder %s29, 3
      %p222 = por %p220, %p221
      %p224 = scmp.ne.s32.totalorder %s209, %s223
      %p225 = scmp.eq.s32.totalorder %s29, 0
      %p226 = por %p224, %p225
      %s227 = ssub.s32 %s30, %s42
      %s228 = ssub.s32 %s31, %s38
      %s229 = sor.u32 %s227, %s228
      %p230 = scmp.eq.s32.totalorder %s229, 0
      %s232 = sadd.s32 %s231, 1
      %s233 = scalar_select %p230, %s231, %s232
      %p236 = pneg %p230
      %p237 = scmp.eq.s32.totalorder %s23, 3
      %p238 = por %p236, %p237
      %p239 = scmp.ne.s32.totalorder %s231, %s234
      %p240 = scmp.eq.s32.totalorder %s23, 0
      %p241 = por %p239, %p240
      %p242 = scmp.ne.s32.totalorder %s231, %s234
      %p243 = scmp.eq.s32.totalorder %s28, 3
      %p244 = por %p242, %p243
      %p245 = scmp.ne.s32.totalorder %s234, %s235
      %p246 = scmp.eq.s32.totalorder %s28, 0
      %p247 = por %p245, %p246
      %p248 = scmp.ne.s32.totalorder %s234, %s235
      %p249 = scmp.eq.s32.totalorder %s29, 3
      %p250 = por %p248, %p249
      %p252 = scmp.ne.s32.totalorder %s235, %s251
      %p253 = scmp.eq.s32.totalorder %s29, 0
      %p254 = por %p252, %p253
      %p255 = scmp.le.s32.totalorder 1, %s23
      %p256 = scmp.lt.s32.totalorder %s23, 5
      %p257 = pnand %p255, %p256
      %p258 = pneg %p257
      // Predicated region
      $region9: #{tpu_custom_call.1} parent=5 // pred_check
        _
      $region10: #{tpu_custom_call.1} parent=5 // pred_check_branch
        %260 = sbr.rel (%p257) target = $region12
      $region11: #{tpu_custom_call.1} parent=5 // pred_region
        %s261 = ssub.s32 %s23, 1
        // Predicated region
        $region13: #{tpu_custom_call.1} parent=11 // pred_check
          %p262 = pneg %p114
        $region14: #{tpu_custom_call.1} parent=11 // pred_check_branch
          %264 = sbr.rel (%p262) target = $region16
        $region15: #{tpu_custom_call.1} parent=11 // pred_region
          _
        $region16: #{tpu_custom_call.1} parent=11 // pred_fallthru
          _
        // Predicated region
        $region17: #{tpu_custom_call.1} parent=11 // pred_check
          %p265 = pneg %p135
        $region18: #{tpu_custom_call.1} parent=11 // pred_check_branch
          %267 = sbr.rel (%p265) target = $region20
        $region19: #{tpu_custom_call.1} parent=11 // pred_region
          _
        $region20: #{tpu_custom_call.1} parent=11 // pred_fallthru
          _
        // Predicated region
        $region21: #{tpu_custom_call.1} parent=11 // pred_check
          %p268 = pneg %p156
        $region22: #{tpu_custom_call.1} parent=11 // pred_check_branch
          %270 = sbr.rel (%p268) target = $region24
        $region23: #{tpu_custom_call.1} parent=11 // pred_region
          _
        $region24: #{tpu_custom_call.1} parent=11 // pred_fallthru
          _
        // Predicated region
        $region25: #{tpu_custom_call.1} parent=11 // pred_check
          %p271 = pneg %p177
        $region26: #{tpu_custom_call.1} parent=11 // pred_check_branch
          %273 = sbr.rel (%p271) target = $region28
        $region27: #{tpu_custom_call.1} parent=11 // pred_region
          _
        $region28: #{tpu_custom_call.1} parent=11 // pred_fallthru
          _
        // Predicated region
        $region29: #{tpu_custom_call.1} parent=11 // pred_check
          %p274 = pneg %p198
        $region30: #{tpu_custom_call.1} parent=11 // pred_check_branch
          %276 = sbr.rel (%p274) target = $region32
        $region31: #{tpu_custom_call.1} parent=11 // pred_region
          _
        $region32: #{tpu_custom_call.1} parent=11 // pred_fallthru
          _
        // Predicated region
        $region33: #{tpu_custom_call.1} parent=11 // pred_check
          %p277 = pneg %p219
        $region34: #{tpu_custom_call.1} parent=11 // pred_check_branch
          %279 = sbr.rel (%p277) target = $region36
        $region35: #{tpu_custom_call.1} parent=11 // pred_region
          _
        $region36: #{tpu_custom_call.1} parent=11 // pred_fallthru
          _
      $region12: #{tpu_custom_call.1} parent=5 // pred_fallthru
        _
      %p280 = scmp.lt.s32.totalorder %s23, 4
      // Predicated region
      $region37: #{tpu_custom_call.1} parent=5 // pred_check
        %p281 = pneg %p280
      $region38: #{tpu_custom_call.1} parent=5 // pred_check_branch
        %283 = sbr.rel (%p281) target = $region40
      $region39: #{tpu_custom_call.1} parent=5 // pred_region
        // Predicated region
        $region41: #{tpu_custom_call.1} parent=39 // pred_check
          %p284 = pneg %p57
        $region42: #{tpu_custom_call.1} parent=39 // pred_check_branch
          %286 = sbr.rel (%p284) target = $region44
        $region43: #{tpu_custom_call.1} parent=39 // pred_region
          %s287 = sand.u32 %s47, 1
          %s288 = scalar_lea.sflag [#allocation4], %s287
          %s289 = sand.u32 %s47, 1
          %s290 = smul.addr %s289, 64
          %s291 = scalar_lea.vmem [#allocation3], %s290
          %293 = vsyncadd %s288, 0
          %s294 = smul.addr %s31, 8
          %s295 = smul.addr %s30, 16
          %s296 = sadd.s32 %s294, %s295
          %s297 = smul.addr %s296, 8
          %s298 = scalar_lea.hbm %s0, %s297
          %s299 = sshll.u32 %s298, 4
          %s300 = int_to_ptr.hbm [resolvable:$true] %s299
          %s301 = sshll.u32 %s291, 4
          %s302 = int_to_ptr.vmem [resolvable:$true] %s301
          %307 = dma.hbm_to_vmem [thread:$0]  %s300, 1024, %s302, %s288, 128, 128, 8
        $region44: #{tpu_custom_call.1} parent=39 // pred_fallthru
          _
        // Predicated region
        $region45: #{tpu_custom_call.1} parent=39 // pred_check
          %p308 = pneg %p87
        $region46: #{tpu_custom_call.1} parent=39 // pred_check_branch
          %310 = sbr.rel (%p308) target = $region48
        $region47: #{tpu_custom_call.1} parent=39 // pred_region
          %s311 = sand.u32 %s77, 1
          %s312 = scalar_lea.sflag [#allocation7], %s311
          %s313 = sand.u32 %s77, 1
          %s314 = smul.addr %s313, 64
          %s315 = scalar_lea.vmem [#allocation6], %s314
          %s316 = sadd.s32 %s30, 1
          %318 = vsyncadd %s312, 0
          %s319 = smul.addr %s31, 8
          %s320 = smul.addr %s316, 16
          %s321 = sadd.s32 %s319, %s320
          %s322 = smul.addr %s321, 8
          %s323 = scalar_lea.hbm %s1, %s322
          %s324 = sshll.u32 %s323, 4
          %s325 = int_to_ptr.hbm [resolvable:$true] %s324
          %s326 = sshll.u32 %s315, 4
          %s327 = int_to_ptr.vmem [resolvable:$true] %s326
          %332 = dma.hbm_to_vmem [thread:$0]  %s325, 1024, %s327, %s312, 128, 128, 8
        $region48: #{tpu_custom_call.1} parent=39 // pred_fallthru
          _
      $region40: #{tpu_custom_call.1} parent=5 // pred_fallthru
        _
      %p333 = scmp.le.s32.totalorder 1, %s23
      %p334 = scmp.lt.s32.totalorder %s23, 5
      %p335 = pnand %p333, %p334
      %p336 = pneg %p335
      // Predicated region
      $region49: #{tpu_custom_call.1} parent=5 // pred_check
        _
      $region50: #{tpu_custom_call.1} parent=5 // pred_check_branch
        %338 = sbr.rel (%p335) target = $region52
      $region51: #{tpu_custom_call.1} parent=5 // pred_region
        %s339 = ssub.s32 %s23, 1
        %s340 = sand.u32 %s50, 1
        %s341 = scalar_lea.sflag [#allocation4], %s340
        %s342 = sand.u32 %s50, 1
        %s343 = smul.addr %s342, 64
        %s344 = scalar_lea.vmem [#allocation3], %s343
        // Predicated region
        $region53: #{tpu_custom_call.1} parent=51 // pred_check
          %p345 = pneg %p63
        $region54: #{tpu_custom_call.1} parent=51 // pred_check_branch
          %347 = sbr.rel (%p345) target = $region56
        $region55: #{tpu_custom_call.1} parent=51 // pred_region
          %349 = dma.done %s341, 1024
        $region56: #{tpu_custom_call.1} parent=51 // pred_fallthru
          _
        %s350 = sand.u32 %s80, 1
        %s351 = scalar_lea.sflag [#allocation7], %s350
        %s352 = sand.u32 %s80, 1
        %s353 = smul.addr %s352, 64
        %s354 = scalar_lea.vmem [#allocation6], %s353
        // Predicated region
        $region57: #{tpu_custom_call.1} parent=51 // pred_check
          %p355 = pneg %p93
        $region58: #{tpu_custom_call.1} parent=51 // pred_check_branch
          %357 = sbr.rel (%p355) target = $region60
        $region59: #{tpu_custom_call.1} parent=51 // pred_region
          %359 = dma.done %s351, 1024
        $region60: #{tpu_custom_call.1} parent=51 // pred_fallthru
          _
        %s360 = sand.u32 %s50, 1
        %s361 = scalar_lea.sflag [#allocation4], %s360
        %s362 = sand.u32 %s50, 1
        %s363 = smul.addr %s362, 64
        %s364 = scalar_lea.vmem [#allocation3], %s363
        %p365 = pneg %p63
        %p366 = pneg %p60
        %s367 = sand.u32 %s80, 1
        %s368 = scalar_lea.sflag [#allocation7], %s367
        %s369 = sand.u32 %s80, 1
        %s370 = smul.addr %s369, 64
        %s371 = scalar_lea.vmem [#allocation6], %s370
        %p372 = pneg %p93
        %p373 = pneg %p90
        %p374 = pneg %p114
        %p375 = pneg %p111
        %p376 = pneg %p135
        %p377 = pneg %p132
        %p378 = pneg %p156
        %p379 = pneg %p153
        %p380 = pneg %p177
        %p381 = pneg %p174
        %p382 = pneg %p198
        %p383 = pneg %p195
        %p384 = pneg %p219
        %p385 = pneg %p216
        %p386 = pneg %p247
        %p387 = pneg %p244
        %s388 = sand.u32 %s234, 1
        %s389 = scalar_lea.sflag [#allocation5], %s388
        %s390 = sand.u32 %s234, 1
        %s391 = smul.addr %s390, 64
        %s392 = scalar_lea.vmem [#allocation8], %s391
        %s393 = sadd.s32 %s32, 1
        %vm395 = vcmask 130048
        %396 = vst.msk [vmem:[#allocation2] sm:$0xff] %vm395, 0.0
        %397 = vst.msk [vmem:[#allocation2 + $0x8] sm:$0xff] %vm395, 0.0
        %398 = vst.msk [vmem:[#allocation2 + $0x10] sm:$0xff] %vm395, 0.0
        %399 = vst.msk [vmem:[#allocation2 + $0x18] sm:$0xff] %vm395, 0.0
        %400 = vst.msk [vmem:[#allocation2 + $0x20] sm:$0xff] %vm395, 0.0
        %401 = vst.msk [vmem:[#allocation2 + $0x28] sm:$0xff] %vm395, 0.0
        %402 = vst.msk [vmem:[#allocation2 + $0x30] sm:$0xff] %vm395, 0.0
        %403 = vst.msk [vmem:[#allocation2 + $0x38] sm:$0xff] %vm395, 0.0
        %404 = vst.msk [vmem:[#allocation2 + $0x40] sm:$0xff] %vm395, 0.0
        %405 = vst.msk [vmem:[#allocation2 + $0x48] sm:$0xff] %vm395, 0.0
        %406 = vst.msk [vmem:[#allocation2 + $0x50] sm:$0xff] %vm395, 0.0
        %407 = vst.msk [vmem:[#allocation2 + $0x58] sm:$0xff] %vm395, 0.0
        %408 = vst.msk [vmem:[#allocation2 + $0x60] sm:$0xff] %vm395, 0.0
        %409 = vst.msk [vmem:[#allocation2 + $0x68] sm:$0xff] %vm395, 0.0
        %410 = vst.msk [vmem:[#allocation2 + $0x70] sm:$0xff] %vm395, 0.0
        %411 = vst.msk [vmem:[#allocation2 + $0x78] sm:$0xff] %vm395, 0.0
        %412 = vst.msk [vmem:[#allocation2 + $0x80] sm:$0xff] %vm395, 0.0
        %413 = vst.msk [vmem:[#allocation2 + $0x88] sm:$0xff] %vm395, 0.0
        %414 = vst.msk [vmem:[#allocation2 + $0x90] sm:$0xff] %vm395, 0.0
        %415 = vst.msk [vmem:[#allocation2 + $0x98] sm:$0xff] %vm395, 0.0
        %416 = vst.msk [vmem:[#allocation2 + $0xa0] sm:$0xff] %vm395, 0.0
        %417 = vst.msk [vmem:[#allocation2 + $0xa8] sm:$0xff] %vm395, 0.0
        %418 = vst.msk [vmem:[#allocation2 + $0xb0] sm:$0xff] %vm395, 0.0
        %419 = vst.msk [vmem:[#allocation2 + $0xb8] sm:$0xff] %vm395, 0.0
        %420 = vst.msk [vmem:[#allocation2 + $0xc0] sm:$0xff] %vm395, 0.0
        %421 = vst.msk [vmem:[#allocation2 + $0xc8] sm:$0xff] %vm395, 0.0
        %422 = vst.msk [vmem:[#allocation2 + $0xd0] sm:$0xff] %vm395, 0.0
        %423 = vst.msk [vmem:[#allocation2 + $0xd8] sm:$0xff] %vm395, 0.0
        %424 = vst.msk [vmem:[#allocation2 + $0xe0] sm:$0xff] %vm395, 0.0
        %425 = vst.msk [vmem:[#allocation2 + $0xe8] sm:$0xff] %vm395, 0.0
        %426 = vst.msk [vmem:[#allocation2 + $0xf0] sm:$0xff] %vm395, 0.0
        %427 = vst.msk [vmem:[#allocation2 + $0xf8] sm:$0xff] %vm395, 0.0
        %428 = vst.msk [vmem:[#allocation2 + $0x100] sm:$0xff] %vm395, 0.0
        %429 = vst.msk [vmem:[#allocation2 + $0x108] sm:$0xff] %vm395, 0.0
        %430 = vst.msk [vmem:[#allocation2 + $0x110] sm:$0xff] %vm395, 0.0
        %431 = vst.msk [vmem:[#allocation2 + $0x118] sm:$0xff] %vm395, 0.0
        %432 = vst.msk [vmem:[#allocation2 + $0x120] sm:$0xff] %vm395, 0.0
        %433 = vst.msk [vmem:[#allocation2 + $0x128] sm:$0xff] %vm395, 0.0
        %434 = vst.msk [vmem:[#allocation2 + $0x130] sm:$0xff] %vm395, 0.0
        %435 = vst.msk [vmem:[#allocation2 + $0x138] sm:$0xff] %vm395, 0.0
        %v436 = vld [vmem:[%s344] sm:$0xff]
        %v437 = vld [vmem:[%s344 + $0x8] sm:$0xff]
        %v438 = vld [vmem:[%s344 + $0x10] sm:$0xff]
        %v439 = vld [vmem:[%s344 + $0x18] sm:$0xff]
        %v440 = vld [vmem:[%s344 + $0x20] sm:$0xff]
        %v441 = vld [vmem:[%s344 + $0x28] sm:$0xff]
        %v442 = vld [vmem:[%s344 + $0x30] sm:$0xff]
        %v443 = vld [vmem:[%s344 + $0x38] sm:$0xff]
        %s444 = scalar_lea.vmem [#allocation2], 16
        %445 = vst.msk [vmem:[%s444 + $0x1] sm:$0xff] %vm395, %v436
        %446 = vst.msk [vmem:[%s444 + $0x11] sm:$0xff] %vm395, %v437
        %447 = vst.msk [vmem:[%s444 + $0x21] sm:$0xff] %vm395, %v438
        %448 = vst.msk [vmem:[%s444 + $0x31] sm:$0xff] %vm395, %v439
        %449 = vst.msk [vmem:[%s444 + $0x41] sm:$0xff] %vm395, %v440
        %450 = vst.msk [vmem:[%s444 + $0x51] sm:$0xff] %vm395, %v441
        %451 = vst.msk [vmem:[%s444 + $0x61] sm:$0xff] %vm395, %v442
        %452 = vst.msk [vmem:[%s444 + $0x71] sm:$0xff] %vm395, %v443
        %v453 = vld [vmem:[%s354] sm:$0xff]
        %v454 = vld [vmem:[%s354 + $0x8] sm:$0xff]
        %v455 = vld [vmem:[%s354 + $0x10] sm:$0xff]
        %v456 = vld [vmem:[%s354 + $0x18] sm:$0xff]
        %v457 = vld [vmem:[%s354 + $0x20] sm:$0xff]
        %v458 = vld [vmem:[%s354 + $0x28] sm:$0xff]
        %v459 = vld [vmem:[%s354 + $0x30] sm:$0xff]
        %v460 = vld [vmem:[%s354 + $0x38] sm:$0xff]
        %s461 = scalar_lea.vmem [#allocation2], 176
        %462 = vst.msk [vmem:[%s461 + $0x1] sm:$0xff] %vm395, %v453
        %463 = vst.msk [vmem:[%s461 + $0x11] sm:$0xff] %vm395, %v454
        %464 = vst.msk [vmem:[%s461 + $0x21] sm:$0xff] %vm395, %v455
        %465 = vst.msk [vmem:[%s461 + $0x31] sm:$0xff] %vm395, %v456
        %466 = vst.msk [vmem:[%s461 + $0x41] sm:$0xff] %vm395, %v457
        %467 = vst.msk [vmem:[%s461 + $0x51] sm:$0xff] %vm395, %v458
        %468 = vst.msk [vmem:[%s461 + $0x61] sm:$0xff] %vm395, %v459
        %469 = vst.msk [vmem:[%s461 + $0x71] sm:$0xff] %vm395, %v460
        %v470 = vld [vmem:[%s2] sm:$0xff]
        %v471 = vld [vmem:[%s2 + $0x8] sm:$0x1]
        %v472 = vld [vmem:[%s2 + $0x10] sm:$0xff]
        %v473 = vld [vmem:[%s2 + $0x18] sm:$0x1]
        %v474 = vld [vmem:[#allocation2] sm:$0xff]
        %v475 = vld [vmem:[#allocation2 + $0x10] sm:$0xff]
        %v476 = vld [vmem:[#allocation2 + $0x20] sm:$0xff]
        %v477 = vld [vmem:[#allocation2 + $0x30] sm:$0xff]
        %v478 = vld [vmem:[#allocation2 + $0x40] sm:$0xff]
        %v479 = vld [vmem:[#allocation2 + $0x50] sm:$0xff]
        %v480 = vld [vmem:[#allocation2 + $0x60] sm:$0xff]
        %v481 = vld [vmem:[#allocation2 + $0x70] sm:$0xff]
        %v482 = vperm.slane %v470, 0
        %v483 = vmul.f32 %v474, %v482
        %v484 = vmul.f32 %v475, %v482
        %v485 = vmul.f32 %v476, %v482
        %v486 = vmul.f32 %v477, %v482
        %v487 = vmul.f32 %v478, %v482
        %v488 = vmul.f32 %v479, %v482
        %v489 = vmul.f32 %v480, %v482
        %v490 = vmul.f32 %v481, %v482
        %v491 = vadd.f32 %v483, 0.0
        %v492 = vadd.f32 %v484, 0.0
        %v493 = vadd.f32 %v485, 0.0
        %v494 = vadd.f32 %v486, 0.0
        %v495 = vadd.f32 %v487, 0.0
        %v496 = vadd.f32 %v488, 0.0
        %v497 = vadd.f32 %v489, 0.0
        %v498 = vadd.f32 %v490, 0.0
        %v499 = vld [vmem:[#allocation2 + $0x1] sm:$0xff]
        %v500 = vld [vmem:[#allocation2 + $0x11] sm:$0xff]
        %v501 = vld [vmem:[#allocation2 + $0x21] sm:$0xff]
        %v502 = vld [vmem:[#allocation2 + $0x31] sm:$0xff]
        %v503 = vld [vmem:[#allocation2 + $0x41] sm:$0xff]
        %v504 = vld [vmem:[#allocation2 + $0x51] sm:$0xff]
        %v505 = vld [vmem:[#allocation2 + $0x61] sm:$0xff]
        %v506 = vld [vmem:[#allocation2 + $0x71] sm:$0xff]
        %v507 = vperm.slane %v470, 1
        %v508 = vmul.f32 %v499, %v507
        %v509 = vmul.f32 %v500, %v507
        %v510 = vmul.f32 %v501, %v507
        %v511 = vmul.f32 %v502, %v507
        %v512 = vmul.f32 %v503, %v507
        %v513 = vmul.f32 %v504, %v507
        %v514 = vmul.f32 %v505, %v507
        %v515 = vmul.f32 %v506, %v507
        %v516 = vadd.f32 %v491, %v508
        %v517 = vadd.f32 %v492, %v509
        %v518 = vadd.f32 %v493, %v510
        %v519 = vadd.f32 %v494, %v511
        %v520 = vadd.f32 %v495, %v512
        %v521 = vadd.f32 %v496, %v513
        %v522 = vadd.f32 %v497, %v514
        %v523 = vadd.f32 %v498, %v515
        %v524 = vld [vmem:[#allocation2 + $0x2] sm:$0xff]
        %v525 = vld [vmem:[#allocation2 + $0x12] sm:$0xff]
        %v526 = vld [vmem:[#allocation2 + $0x22] sm:$0xff]
        %v527 = vld [vmem:[#allocation2 + $0x32] sm:$0xff]
        %v528 = vld [vmem:[#allocation2 + $0x42] sm:$0xff]
        %v529 = vld [vmem:[#allocation2 + $0x52] sm:$0xff]
        %v530 = vld [vmem:[#allocation2 + $0x62] sm:$0xff]
        %v531 = vld [vmem:[#allocation2 + $0x72] sm:$0xff]
        %v532 = vperm.slane %v470, 2
        %v533 = vmul.f32 %v524, %v532
        %v534 = vmul.f32 %v525, %v532
        %v535 = vmul.f32 %v526, %v532
        %v536 = vmul.f32 %v527, %v532
        %v537 = vmul.f32 %v528, %v532
        %v538 = vmul.f32 %v529, %v532
        %v539 = vmul.f32 %v530, %v532
        %v540 = vmul.f32 %v531, %v532
        %v541 = vadd.f32 %v516, %v533
        %v542 = vadd.f32 %v517, %v534
        %v543 = vadd.f32 %v518, %v535
        %v544 = vadd.f32 %v519, %v536
        %v545 = vadd.f32 %v520, %v537
        %v546 = vadd.f32 %v521, %v538
        %v547 = vadd.f32 %v522, %v539
        %v548 = vadd.f32 %v523, %v540
        %v549 = vld [vmem:[%s444] sm:$0xff]
        %v550 = vld [vmem:[%s444 + $0x10] sm:$0xff]
        %v551 = vld [vmem:[%s444 + $0x20] sm:$0xff]
        %v552 = vld [vmem:[%s444 + $0x30] sm:$0xff]
        %v553 = vld [vmem:[%s444 + $0x40] sm:$0xff]
        %v554 = vld [vmem:[%s444 + $0x50] sm:$0xff]
        %v555 = vld [vmem:[%s444 + $0x60] sm:$0xff]
        %v556 = vld [vmem:[%s444 + $0x70] sm:$0xff]
        %v557 = vperm.slane %v470, 3
        %v558 = vmul.f32 %v549, %v557
        %v559 = vmul.f32 %v550, %v557
        %v560 = vmul.f32 %v551, %v557
        %v561 = vmul.f32 %v552, %v557
        %v562 = vmul.f32 %v553, %v557
        %v563 = vmul.f32 %v554, %v557
        %v564 = vmul.f32 %v555, %v557
        %v565 = vmul.f32 %v556, %v557
        %v566 = vadd.f32 %v541, %v558
        %v567 = vadd.f32 %v542, %v559
        %v568 = vadd.f32 %v543, %v560
        %v569 = vadd.f32 %v544, %v561
        %v570 = vadd.f32 %v545, %v562
        %v571 = vadd.f32 %v546, %v563
        %v572 = vadd.f32 %v547, %v564
        %v573 = vadd.f32 %v548, %v565
        %v574 = vld [vmem:[%s444 + $0x1] sm:$0xff]
        %v575 = vld [vmem:[%s444 + $0x11] sm:$0xff]
        %v576 = vld [vmem:[%s444 + $0x21] sm:$0xff]
        %v577 = vld [vmem:[%s444 + $0x31] sm:$0xff]
        %v578 = vld [vmem:[%s444 + $0x41] sm:$0xff]
        %v579 = vld [vmem:[%s444 + $0x51] sm:$0xff]
        %v580 = vld [vmem:[%s444 + $0x61] sm:$0xff]
        %v581 = vld [vmem:[%s444 + $0x71] sm:$0xff]
        %v582 = vperm.slane %v470, 4
        %v583 = vmul.f32 %v574, %v582
        %v584 = vmul.f32 %v575, %v582
        %v585 = vmul.f32 %v576, %v582
        %v586 = vmul.f32 %v577, %v582
        %v587 = vmul.f32 %v578, %v582
        %v588 = vmul.f32 %v579, %v582
        %v589 = vmul.f32 %v580, %v582
        %v590 = vmul.f32 %v581, %v582
        %v591 = vadd.f32 %v566, %v583
        %v592 = vadd.f32 %v567, %v584
        %v593 = vadd.f32 %v568, %v585
        %v594 = vadd.f32 %v569, %v586
        %v595 = vadd.f32 %v570, %v587
        %v596 = vadd.f32 %v571, %v588
        %v597 = vadd.f32 %v572, %v589
        %v598 = vadd.f32 %v573, %v590
        %v599 = vld [vmem:[%s444 + $0x2] sm:$0xff]
        %v600 = vld [vmem:[%s444 + $0x12] sm:$0xff]
        %v601 = vld [vmem:[%s444 + $0x22] sm:$0xff]
        %v602 = vld [vmem:[%s444 + $0x32] sm:$0xff]
        %v603 = vld [vmem:[%s444 + $0x42] sm:$0xff]
        %v604 = vld [vmem:[%s444 + $0x52] sm:$0xff]
        %v605 = vld [vmem:[%s444 + $0x62] sm:$0xff]
        %v606 = vld [vmem:[%s444 + $0x72] sm:$0xff]
        %v607 = vperm.slane %v470, 5
        %v608 = vmul.f32 %v599, %v607
        %v609 = vmul.f32 %v600, %v607
        %v610 = vmul.f32 %v601, %v607
        %v611 = vmul.f32 %v602, %v607
        %v612 = vmul.f32 %v603, %v607
        %v613 = vmul.f32 %v604, %v607
        %v614 = vmul.f32 %v605, %v607
        %v615 = vmul.f32 %v606, %v607
        %v616 = vadd.f32 %v591, %v608
        %v617 = vadd.f32 %v592, %v609
        %v618 = vadd.f32 %v593, %v610
        %v619 = vadd.f32 %v594, %v611
        %v620 = vadd.f32 %v595, %v612
        %v621 = vadd.f32 %v596, %v613
        %v622 = vadd.f32 %v597, %v614
        %v623 = vadd.f32 %v598, %v615
        %s624 = scalar_lea.vmem [#allocation2], 32
        %v625 = vld [vmem:[%s624] sm:$0xff]
        %v626 = vld [vmem:[%s624 + $0x10] sm:$0xff]
        %v627 = vld [vmem:[%s624 + $0x20] sm:$0xff]
        %v628 = vld [vmem:[%s624 + $0x30] sm:$0xff]
        %v629 = vld [vmem:[%s624 + $0x40] sm:$0xff]
        %v630 = vld [vmem:[%s624 + $0x50] sm:$0xff]
        %v631 = vld [vmem:[%s624 + $0x60] sm:$0xff]
        %v632 = vld [vmem:[%s624 + $0x70] sm:$0xff]
        %v633 = vperm.slane %v470, 6
        %v634 = vmul.f32 %v625, %v633
        %v635 = vmul.f32 %v626, %v633
        %v636 = vmul.f32 %v627, %v633
        %v637 = vmul.f32 %v628, %v633
        %v638 = vmul.f32 %v629, %v633
        %v639 = vmul.f32 %v630, %v633
        %v640 = vmul.f32 %v631, %v633
        %v641 = vmul.f32 %v632, %v633
        %v642 = vadd.f32 %v616, %v634
        %v643 = vadd.f32 %v617, %v635
        %v644 = vadd.f32 %v618, %v636
        %v645 = vadd.f32 %v619, %v637
        %v646 = vadd.f32 %v620, %v638
        %v647 = vadd.f32 %v621, %v639
        %v648 = vadd.f32 %v622, %v640
        %v649 = vadd.f32 %v623, %v641
        %v650 = vld [vmem:[%s624 + $0x1] sm:$0xff]
        %v651 = vld [vmem:[%s624 + $0x11] sm:$0xff]
        %v652 = vld [vmem:[%s624 + $0x21] sm:$0xff]
        %v653 = vld [vmem:[%s624 + $0x31] sm:$0xff]
        %v654 = vld [vmem:[%s624 + $0x41] sm:$0xff]
        %v655 = vld [vmem:[%s624 + $0x51] sm:$0xff]
        %v656 = vld [vmem:[%s624 + $0x61] sm:$0xff]
        %v657 = vld [vmem:[%s624 + $0x71] sm:$0xff]
        %v658 = vperm.slane %v470, 7
        %v659 = vmul.f32 %v650, %v658
        %v660 = vmul.f32 %v651, %v658
        %v661 = vmul.f32 %v652, %v658
        %v662 = vmul.f32 %v653, %v658
        %v663 = vmul.f32 %v654, %v658
        %v664 = vmul.f32 %v655, %v658
        %v665 = vmul.f32 %v656, %v658
        %v666 = vmul.f32 %v657, %v658
        %v667 = vadd.f32 %v642, %v659
        %v668 = vadd.f32 %v643, %v660
        %v669 = vadd.f32 %v644, %v661
        %v670 = vadd.f32 %v645, %v662
        %v671 = vadd.f32 %v646, %v663
        %v672 = vadd.f32 %v647, %v664
        %v673 = vadd.f32 %v648, %v665
        %v674 = vadd.f32 %v649, %v666
        %v675 = vld [vmem:[%s624 + $0x2] sm:$0xff]
        %v676 = vld [vmem:[%s624 + $0x12] sm:$0xff]
        %v677 = vld [vmem:[%s624 + $0x22] sm:$0xff]
        %v678 = vld [vmem:[%s624 + $0x32] sm:$0xff]
        %v679 = vld [vmem:[%s624 + $0x42] sm:$0xff]
        %v680 = vld [vmem:[%s624 + $0x52] sm:$0xff]
        %v681 = vld [vmem:[%s624 + $0x62] sm:$0xff]
        %v682 = vld [vmem:[%s624 + $0x72] sm:$0xff]
        %v683 = vperm.slane %v471, 0
        %v684 = vmul.f32 %v675, %v683
        %v685 = vmul.f32 %v676, %v683
        %v686 = vmul.f32 %v677, %v683
        %v687 = vmul.f32 %v678, %v683
        %v688 = vmul.f32 %v679, %v683
        %v689 = vmul.f32 %v680, %v683
        %v690 = vmul.f32 %v681, %v683
        %v691 = vmul.f32 %v682, %v683
        %v692 = vadd.f32 %v667, %v684
        %v693 = vadd.f32 %v668, %v685
        %v694 = vadd.f32 %v669, %v686
        %v695 = vadd.f32 %v670, %v687
        %v696 = vadd.f32 %v671, %v688
        %v697 = vadd.f32 %v672, %v689
        %v698 = vadd.f32 %v673, %v690
        %v699 = vadd.f32 %v674, %v691
        %v700 = vld [vmem:[%s3] sm:$0x1]
        %v701 = vperm.slane %v700, 0
        %v702 = vmul.f32 %v692, %v701
        %v703 = vmul.f32 %v693, %v701
        %v704 = vmul.f32 %v694, %v701
        %v705 = vmul.f32 %v695, %v701
        %v706 = vmul.f32 %v696, %v701
        %v707 = vmul.f32 %v697, %v701
        %v708 = vmul.f32 %v698, %v701
        %v709 = vmul.f32 %v699, %v701
        %v710 = vld [vmem:[%s4] sm:$0x1]
        %v711 = vperm.slane %v710, 0
        %v712 = vadd.f32 %v702, %v711
        %v713 = vadd.f32 %v703, %v711
        %v714 = vadd.f32 %v704, %v711
        %v715 = vadd.f32 %v705, %v711
        %v716 = vadd.f32 %v706, %v711
        %v717 = vadd.f32 %v707, %v711
        %v718 = vadd.f32 %v708, %v711
        %v719 = vadd.f32 %v709, %v711
        %v720 = vmax.f32 %v712, 0.0
        %v721 = vmax.f32 %v713, 0.0
        %v722 = vmax.f32 %v714, 0.0
        %v723 = vmax.f32 %v715, 0.0
        %v724 = vmax.f32 %v716, 0.0
        %v725 = vmax.f32 %v717, 0.0
        %v726 = vmax.f32 %v718, 0.0
        %v727 = vmax.f32 %v719, 0.0
        %v728 = vmin.f32 %v720, 6.0
        %v729 = vmin.f32 %v721, 6.0
        %v730 = vmin.f32 %v722, 6.0
        %v731 = vmin.f32 %v723, 6.0
        %v732 = vmin.f32 %v724, 6.0
        %v733 = vmin.f32 %v725, 6.0
        %v734 = vmin.f32 %v726, 6.0
        %v735 = vmin.f32 %v727, 6.0
        %v736 = vpack.c.bf16 %v729, %v728
        %v737 = vpack.c.bf16 %v731, %v730
        %v738 = vpack.c.bf16 %v733, %v732
        %v739 = vpack.c.bf16 %v735, %v734
        %s740 = scalar_lea.vmem [#allocation2], 160
        %v741 = vld [vmem:[%s740] sm:$0xff]
        %v742 = vld [vmem:[%s740 + $0x10] sm:$0xff]
        %v743 = vld [vmem:[%s740 + $0x20] sm:$0xff]
        %v744 = vld [vmem:[%s740 + $0x30] sm:$0xff]
        %v745 = vld [vmem:[%s740 + $0x40] sm:$0xff]
        %v746 = vld [vmem:[%s740 + $0x50] sm:$0xff]
        %v747 = vld [vmem:[%s740 + $0x60] sm:$0xff]
        %v748 = vld [vmem:[%s740 + $0x70] sm:$0xff]
        %v749 = vperm.slane %v472, 0
        %v750 = vmul.f32 %v741, %v749
        %v751 = vmul.f32 %v742, %v749
        %v752 = vmul.f32 %v743, %v749
        %v753 = vmul.f32 %v744, %v749
        %v754 = vmul.f32 %v745, %v749
        %v755 = vmul.f32 %v746, %v749
        %v756 = vmul.f32 %v747, %v749
        %v757 = vmul.f32 %v748, %v749
        %v758 = vadd.f32 %v750, 0.0
        %v759 = vadd.f32 %v751, 0.0
        %v760 = vadd.f32 %v752, 0.0
        %v761 = vadd.f32 %v753, 0.0
        %v762 = vadd.f32 %v754, 0.0
        %v763 = vadd.f32 %v755, 0.0
        %v764 = vadd.f32 %v756, 0.0
        %v765 = vadd.f32 %v757, 0.0
        %v766 = vld [vmem:[%s740 + $0x1] sm:$0xff]
        %v767 = vld [vmem:[%s740 + $0x11] sm:$0xff]
        %v768 = vld [vmem:[%s740 + $0x21] sm:$0xff]
        %v769 = vld [vmem:[%s740 + $0x31] sm:$0xff]
        %v770 = vld [vmem:[%s740 + $0x41] sm:$0xff]
        %v771 = vld [vmem:[%s740 + $0x51] sm:$0xff]
        %v772 = vld [vmem:[%s740 + $0x61] sm:$0xff]
        %v773 = vld [vmem:[%s740 + $0x71] sm:$0xff]
        %v774 = vperm.slane %v472, 1
        %v775 = vmul.f32 %v766, %v774
        %v776 = vmul.f32 %v767, %v774
        %v777 = vmul.f32 %v768, %v774
        %v778 = vmul.f32 %v769, %v774
        %v779 = vmul.f32 %v770, %v774
        %v780 = vmul.f32 %v771, %v774
        %v781 = vmul.f32 %v772, %v774
        %v782 = vmul.f32 %v773, %v774
        %v783 = vadd.f32 %v758, %v775
        %v784 = vadd.f32 %v759, %v776
        %v785 = vadd.f32 %v760, %v777
        %v786 = vadd.f32 %v761, %v778
        %v787 = vadd.f32 %v762, %v779
        %v788 = vadd.f32 %v763, %v780
        %v789 = vadd.f32 %v764, %v781
        %v790 = vadd.f32 %v765, %v782
        %v791 = vld [vmem:[%s740 + $0x2] sm:$0xff]
        %v792 = vld [vmem:[%s740 + $0x12] sm:$0xff]
        %v793 = vld [vmem:[%s740 + $0x22] sm:$0xff]
        %v794 = vld [vmem:[%s740 + $0x32] sm:$0xff]
        %v795 = vld [vmem:[%s740 + $0x42] sm:$0xff]
        %v796 = vld [vmem:[%s740 + $0x52] sm:$0xff]
        %v797 = vld [vmem:[%s740 + $0x62] sm:$0xff]
        %v798 = vld [vmem:[%s740 + $0x72] sm:$0xff]
        %v799 = vperm.slane %v472, 2
        %v800 = vmul.f32 %v791, %v799
        %v801 = vmul.f32 %v792, %v799
        %v802 = vmul.f32 %v793, %v799
        %v803 = vmul.f32 %v794, %v799
        %v804 = vmul.f32 %v795, %v799
        %v805 = vmul.f32 %v796, %v799
        %v806 = vmul.f32 %v797, %v799
        %v807 = vmul.f32 %v798, %v799
        %v808 = vadd.f32 %v783, %v800
        %v809 = vadd.f32 %v784, %v801
        %v810 = vadd.f32 %v785, %v802
        %v811 = vadd.f32 %v786, %v803
        %v812 = vadd.f32 %v787, %v804
        %v813 = vadd.f32 %v788, %v805
        %v814 = vadd.f32 %v789, %v806
        %v815 = vadd.f32 %v790, %v807
        %v816 = vld [vmem:[%s461] sm:$0xff]
        %v817 = vld [vmem:[%s461 + $0x10] sm:$0xff]
        %v818 = vld [vmem:[%s461 + $0x20] sm:$0xff]
        %v819 = vld [vmem:[%s461 + $0x30] sm:$0xff]
        %v820 = vld [vmem:[%s461 + $0x40] sm:$0xff]
        %v821 = vld [vmem:[%s461 + $0x50] sm:$0xff]
        %v822 = vld [vmem:[%s461 + $0x60] sm:$0xff]
        %v823 = vld [vmem:[%s461 + $0x70] sm:$0xff]
        %v824 = vperm.slane %v472, 3
        %v825 = vmul.f32 %v816, %v824
        %v826 = vmul.f32 %v817, %v824
        %v827 = vmul.f32 %v818, %v824
        %v828 = vmul.f32 %v819, %v824
        %v829 = vmul.f32 %v820, %v824
        %v830 = vmul.f32 %v821, %v824
        %v831 = vmul.f32 %v822, %v824
        %v832 = vmul.f32 %v823, %v824
        %v833 = vadd.f32 %v808, %v825
        %v834 = vadd.f32 %v809, %v826
        %v835 = vadd.f32 %v810, %v827
        %v836 = vadd.f32 %v811, %v828
        %v837 = vadd.f32 %v812, %v829
        %v838 = vadd.f32 %v813, %v830
        %v839 = vadd.f32 %v814, %v831
        %v840 = vadd.f32 %v815, %v832
        %v841 = vld [vmem:[%s461 + $0x1] sm:$0xff]
        %v842 = vld [vmem:[%s461 + $0x11] sm:$0xff]
        %v843 = vld [vmem:[%s461 + $0x21] sm:$0xff]
        %v844 = vld [vmem:[%s461 + $0x31] sm:$0xff]
        %v845 = vld [vmem:[%s461 + $0x41] sm:$0xff]
        %v846 = vld [vmem:[%s461 + $0x51] sm:$0xff]
        %v847 = vld [vmem:[%s461 + $0x61] sm:$0xff]
        %v848 = vld [vmem:[%s461 + $0x71] sm:$0xff]
        %v849 = vperm.slane %v472, 4
        %v850 = vmul.f32 %v841, %v849
        %v851 = vmul.f32 %v842, %v849
        %v852 = vmul.f32 %v843, %v849
        %v853 = vmul.f32 %v844, %v849
        %v854 = vmul.f32 %v845, %v849
        %v855 = vmul.f32 %v846, %v849
        %v856 = vmul.f32 %v847, %v849
        %v857 = vmul.f32 %v848, %v849
        %v858 = vadd.f32 %v833, %v850
        %v859 = vadd.f32 %v834, %v851
        %v860 = vadd.f32 %v835, %v852
        %v861 = vadd.f32 %v836, %v853
        %v862 = vadd.f32 %v837, %v854
        %v863 = vadd.f32 %v838, %v855
        %v864 = vadd.f32 %v839, %v856
        %v865 = vadd.f32 %v840, %v857
        %v866 = vld [vmem:[%s461 + $0x2] sm:$0xff]
        %v867 = vld [vmem:[%s461 + $0x12] sm:$0xff]
        %v868 = vld [vmem:[%s461 + $0x22] sm:$0xff]
        %v869 = vld [vmem:[%s461 + $0x32] sm:$0xff]
        %v870 = vld [vmem:[%s461 + $0x42] sm:$0xff]
        %v871 = vld [vmem:[%s461 + $0x52] sm:$0xff]
        %v872 = vld [vmem:[%s461 + $0x62] sm:$0xff]
        %v873 = vld [vmem:[%s461 + $0x72] sm:$0xff]
        %v874 = vperm.slane %v472, 5
        %v875 = vmul.f32 %v866, %v874
        %v876 = vmul.f32 %v867, %v874
        %v877 = vmul.f32 %v868, %v874
        %v878 = vmul.f32 %v869, %v874
        %v879 = vmul.f32 %v870, %v874
        %v880 = vmul.f32 %v871, %v874
        %v881 = vmul.f32 %v872, %v874
        %v882 = vmul.f32 %v873, %v874
        %v883 = vadd.f32 %v858, %v875
        %v884 = vadd.f32 %v859, %v876
        %v885 = vadd.f32 %v860, %v877
        %v886 = vadd.f32 %v861, %v878
        %v887 = vadd.f32 %v862, %v879
        %v888 = vadd.f32 %v863, %v880
        %v889 = vadd.f32 %v864, %v881
        %v890 = vadd.f32 %v865, %v882
        %s891 = scalar_lea.vmem [#allocation2], 192
        %v892 = vld [vmem:[%s891] sm:$0xff]
        %v893 = vld [vmem:[%s891 + $0x10] sm:$0xff]
        %v894 = vld [vmem:[%s891 + $0x20] sm:$0xff]
        %v895 = vld [vmem:[%s891 + $0x30] sm:$0xff]
        %v896 = vld [vmem:[%s891 + $0x40] sm:$0xff]
        %v897 = vld [vmem:[%s891 + $0x50] sm:$0xff]
        %v898 = vld [vmem:[%s891 + $0x60] sm:$0xff]
        %v899 = vld [vmem:[%s891 + $0x70] sm:$0xff]
        %v900 = vperm.slane %v472, 6
        %v901 = vmul.f32 %v892, %v900
        %v902 = vmul.f32 %v893, %v900
        %v903 = vmul.f32 %v894, %v900
        %v904 = vmul.f32 %v895, %v900
        %v905 = vmul.f32 %v896, %v900
        %v906 = vmul.f32 %v897, %v900
        %v907 = vmul.f32 %v898, %v900
        %v908 = vmul.f32 %v899, %v900
        %v909 = vadd.f32 %v883, %v901
        %v910 = vadd.f32 %v884, %v902
        %v911 = vadd.f32 %v885, %v903
        %v912 = vadd.f32 %v886, %v904
        %v913 = vadd.f32 %v887, %v905
        %v914 = vadd.f32 %v888, %v906
        %v915 = vadd.f32 %v889, %v907
        %v916 = vadd.f32 %v890, %v908
        %v917 = vld [vmem:[%s891 + $0x1] sm:$0xff]
        %v918 = vld [vmem:[%s891 + $0x11] sm:$0xff]
        %v919 = vld [vmem:[%s891 + $0x21] sm:$0xff]
        %v920 = vld [vmem:[%s891 + $0x31] sm:$0xff]
        %v921 = vld [vmem:[%s891 + $0x41] sm:$0xff]
        %v922 = vld [vmem:[%s891 + $0x51] sm:$0xff]
        %v923 = vld [vmem:[%s891 + $0x61] sm:$0xff]
        %v924 = vld [vmem:[%s891 + $0x71] sm:$0xff]
        %v925 = vperm.slane %v472, 7
        %v926 = vmul.f32 %v917, %v925
        %v927 = vmul.f32 %v918, %v925
        %v928 = vmul.f32 %v919, %v925
        %v929 = vmul.f32 %v920, %v925
        %v930 = vmul.f32 %v921, %v925
        %v931 = vmul.f32 %v922, %v925
        %v932 = vmul.f32 %v923, %v925
        %v933 = vmul.f32 %v924, %v925
        %v934 = vadd.f32 %v909, %v926
        %v935 = vadd.f32 %v910, %v927
        %v936 = vadd.f32 %v911, %v928
        %v937 = vadd.f32 %v912, %v929
        %v938 = vadd.f32 %v913, %v930
        %v939 = vadd.f32 %v914, %v931
        %v940 = vadd.f32 %v915, %v932
        %v941 = vadd.f32 %v916, %v933
        %v942 = vld [vmem:[%s891 + $0x2] sm:$0xff]
        %v943 = vld [vmem:[%s891 + $0x12] sm:$0xff]
        %v944 = vld [vmem:[%s891 + $0x22] sm:$0xff]
        %v945 = vld [vmem:[%s891 + $0x32] sm:$0xff]
        %v946 = vld [vmem:[%s891 + $0x42] sm:$0xff]
        %v947 = vld [vmem:[%s891 + $0x52] sm:$0xff]
        %v948 = vld [vmem:[%s891 + $0x62] sm:$0xff]
        %v949 = vld [vmem:[%s891 + $0x72] sm:$0xff]
        %v950 = vperm.slane %v473, 0
        %v951 = vmul.f32 %v942, %v950
        %v952 = vmul.f32 %v943, %v950
        %v953 = vmul.f32 %v944, %v950
        %v954 = vmul.f32 %v945, %v950
        %v955 = vmul.f32 %v946, %v950
        %v956 = vmul.f32 %v947, %v950
        %v957 = vmul.f32 %v948, %v950
        %v958 = vmul.f32 %v949, %v950
        %v959 = vadd.f32 %v934, %v951
        %v960 = vadd.f32 %v935, %v952
        %v961 = vadd.f32 %v936, %v953
        %v962 = vadd.f32 %v937, %v954
        %v963 = vadd.f32 %v938, %v955
        %v964 = vadd.f32 %v939, %v956
        %v965 = vadd.f32 %v940, %v957
        %v966 = vadd.f32 %v941, %v958
        %v967 = vld [vmem:[%s3 + $0x1] sm:$0x1]
        %v968 = vperm.slane %v967, 0
        %v969 = vmul.f32 %v959, %v968
        %v970 = vmul.f32 %v960, %v968
        %v971 = vmul.f32 %v961, %v968
        %v972 = vmul.f32 %v962, %v968
        %v973 = vmul.f32 %v963, %v968
        %v974 = vmul.f32 %v964, %v968
        %v975 = vmul.f32 %v965, %v968
        %v976 = vmul.f32 %v966, %v968
        %v977 = vld [vmem:[%s4 + $0x1] sm:$0x1]
        %v978 = vperm.slane %v977, 0
        %v979 = vadd.f32 %v969, %v978
        %v980 = vadd.f32 %v970, %v978
        %v981 = vadd.f32 %v971, %v978
        %v982 = vadd.f32 %v972, %v978
        %v983 = vadd.f32 %v973, %v978
        %v984 = vadd.f32 %v974, %v978
        %v985 = vadd.f32 %v975, %v978
        %v986 = vadd.f32 %v976, %v978
        %v987 = vmax.f32 %v979, 0.0
        %v988 = vmax.f32 %v980, 0.0
        %v989 = vmax.f32 %v981, 0.0
        %v990 = vmax.f32 %v982, 0.0
        %v991 = vmax.f32 %v983, 0.0
        %v992 = vmax.f32 %v984, 0.0
        %v993 = vmax.f32 %v985, 0.0
        %v994 = vmax.f32 %v986, 0.0
        %v995 = vmin.f32 %v987, 6.0
        %v996 = vmin.f32 %v988, 6.0
        %v997 = vmin.f32 %v989, 6.0
        %v998 = vmin.f32 %v990, 6.0
        %v999 = vmin.f32 %v991, 6.0
        %v1000 = vmin.f32 %v992, 6.0
        %v1001 = vmin.f32 %v993, 6.0
        %v1002 = vmin.f32 %v994, 6.0
        %v1003 = vpack.c.bf16 %v996, %v995
        %v1004 = vpack.c.bf16 %v998, %v997
        %v1005 = vpack.c.bf16 %v1000, %v999
        %v1006 = vpack.c.bf16 %v1002, %v1001
        %v1007 = vld [vmem:[%s5] sm:$0xf]
        %v1008 = vld [vmem:[%s5 + $0x4] sm:$0xf]
        %s1009 = scalar_lea.vmem %s5, 8
        %v1010 = vld [vmem:[%s1009] sm:$0xf]
        %v1011 = vld [vmem:[%s1009 + $0x4] sm:$0xf]
        %v1014 = vunpack.c.l.b16 %v1010
        %v1015 = vunpack.c.l.b16 %v1011
        %v1016 = vpack.c.b16 %v1015, %v1014
        %v1019 = vsel %vm395, %v1003, 0
        %v1022 = vsel %vm395, %v1004, 0
        %v1025 = vsel %vm395, %v1005, 0
        %v1028 = vsel %vm395, %v1006, 0
        %1030 = vmatpush.bf16.msra.mxu0 0
        %1031 = vmatpush.bf16.msra.mxu0 0
        %1032 = vmatpush.bf16.msra.mxu0 0
        %1033 = vmatpush.bf16.msra.mxu0 0
        %1034 = vmatpush.bf16.msra.mxu0 0
        %1035 = vmatpush.bf16.msra.mxu0 0
        %1036 = vmatpush.bf16.msra.mxu0 0
        %1037 = vmatpush.bf16.msra.mxu0 %v1016
        %1038 = vmatmul.bf16.gmra.mxu0 %v1019
        %v1039 = vpop.f32.mrf.mxu0
        %v1040 = vadd.f32 0.0, %v1039
        %v1041 = vpop.f32.mrf.mxu0
        %v1042 = vadd.f32 0.0, %v1041
        %1043 = vmatmul.bf16.gmra.mxu0 %v1022
        %v1044 = vpop.f32.mrf.mxu0
        %v1045 = vadd.f32 0.0, %v1044
        %v1046 = vpop.f32.mrf.mxu0
        %v1047 = vadd.f32 0.0, %v1046
        %1048 = vmatmul.bf16.gmra.mxu0 %v1025
        %v1049 = vpop.f32.mrf.mxu0
        %v1050 = vadd.f32 0.0, %v1049
        %v1051 = vpop.f32.mrf.mxu0
        %v1052 = vadd.f32 0.0, %v1051
        %1053 = vmatmul.bf16.gmra.mxu0 %v1028
        %v1054 = vpop.f32.mrf.mxu0
        %v1055 = vadd.f32 0.0, %v1054
        %v1056 = vpop.f32.mrf.mxu0
        %v1057 = vadd.f32 0.0, %v1056
        %1058 = vdwg.mxu0
        %v1061 = vunpack.c.l.b16 %v1007
        %v1062 = vunpack.c.l.b16 %v1008
        %v1063 = vpack.c.b16 %v1062, %v1061
        %v1066 = vsel %vm395, %v736, 0
        %v1069 = vsel %vm395, %v737, 0
        %v1072 = vsel %vm395, %v738, 0
        %v1075 = vsel %vm395, %v739, 0
        %1077 = vmatpush.bf16.msra.mxu0 0
        %1078 = vmatpush.bf16.msra.mxu0 0
        %1079 = vmatpush.bf16.msra.mxu0 0
        %1080 = vmatpush.bf16.msra.mxu0 0
        %1081 = vmatpush.bf16.msra.mxu0 0
        %1082 = vmatpush.bf16.msra.mxu0 0
        %1083 = vmatpush.bf16.msra.mxu0 0
        %1084 = vmatpush.bf16.msra.mxu0 %v1063
        %1085 = vmatmul.bf16.gmra.mxu0 %v1066
        %v1086 = vpop.f32.mrf.mxu0
        %v1087 = vadd.f32 %v1040, %v1086
        %v1088 = vpop.f32.mrf.mxu0
        %v1089 = vadd.f32 %v1042, %v1088
        %1090 = vmatmul.bf16.gmra.mxu0 %v1069
        %v1091 = vpop.f32.mrf.mxu0
        %v1092 = vadd.f32 %v1045, %v1091
        %v1093 = vpop.f32.mrf.mxu0
        %v1094 = vadd.f32 %v1047, %v1093
        %1095 = vmatmul.bf16.gmra.mxu0 %v1072
        %v1096 = vpop.f32.mrf.mxu0
        %v1097 = vadd.f32 %v1050, %v1096
        %v1098 = vpop.f32.mrf.mxu0
        %v1099 = vadd.f32 %v1052, %v1098
        %1100 = vmatmul.bf16.gmra.mxu0 %v1075
        %v1101 = vpop.f32.mrf.mxu0
        %v1102 = vadd.f32 %v1055, %v1101
        %v1103 = vpop.f32.mrf.mxu0
        %v1104 = vadd.f32 %v1057, %v1103
        %1105 = vdwg.mxu0
        %v1106 = vld [vmem:[%s6] sm:$0x1]
        %v1108 = vperm.slane %v1106, 0
        %v1110 = vmul.f32 %v1087, %v1108
        %v1111 = vmul.f32 %v1089, %v1108
        %v1112 = vmul.f32 %v1092, %v1108
        %v1113 = vmul.f32 %v1094, %v1108
        %v1114 = vmul.f32 %v1097, %v1108
        %v1115 = vmul.f32 %v1099, %v1108
        %v1116 = vmul.f32 %v1102, %v1108
        %v1117 = vmul.f32 %v1104, %v1108
        %v1118 = vld [vmem:[%s7] sm:$0x1]
        %v1120 = vperm.slane %v1118, 0
        %v1122 = vadd.f32 %v1110, %v1120
        %v1123 = vadd.f32 %v1111, %v1120
        %v1124 = vadd.f32 %v1112, %v1120
        %v1125 = vadd.f32 %v1113, %v1120
        %v1126 = vadd.f32 %v1114, %v1120
        %v1127 = vadd.f32 %v1115, %v1120
        %v1128 = vadd.f32 %v1116, %v1120
        %v1129 = vadd.f32 %v1117, %v1120
        %v1130 = vmax.f32 %v1122, 0.0
        %v1131 = vmax.f32 %v1123, 0.0
        %v1132 = vmax.f32 %v1124, 0.0
        %v1133 = vmax.f32 %v1125, 0.0
        %v1134 = vmax.f32 %v1126, 0.0
        %v1135 = vmax.f32 %v1127, 0.0
        %v1136 = vmax.f32 %v1128, 0.0
        %v1137 = vmax.f32 %v1129, 0.0
        %v1138 = vmin.f32 %v1130, 6.0
        %v1139 = vmin.f32 %v1131, 6.0
        %v1140 = vmin.f32 %v1132, 6.0
        %v1141 = vmin.f32 %v1133, 6.0
        %v1142 = vmin.f32 %v1134, 6.0
        %v1143 = vmin.f32 %v1135, 6.0
        %v1144 = vmin.f32 %v1136, 6.0
        %v1145 = vmin.f32 %v1137, 6.0
        %1146 = vst.msk [vmem:[%s392] sm:$0xff] %vm395, %v1138
        %1147 = vst.msk [vmem:[%s392 + $0x8] sm:$0xff] %vm395, %v1139
        %1148 = vst.msk [vmem:[%s392 + $0x10] sm:$0xff] %vm395, %v1140
        %1149 = vst.msk [vmem:[%s392 + $0x18] sm:$0xff] %vm395, %v1141
        %1150 = vst.msk [vmem:[%s392 + $0x20] sm:$0xff] %vm395, %v1142
        %1151 = vst.msk [vmem:[%s392 + $0x28] sm:$0xff] %vm395, %v1143
        %1152 = vst.msk [vmem:[%s392 + $0x30] sm:$0xff] %vm395, %v1144
        %1153 = vst.msk [vmem:[%s392 + $0x38] sm:$0xff] %vm395, %v1145
        %s1154 = sand.u32 %s234, 1
        %s1155 = scalar_lea.sflag [#allocation5], %s1154
        %s1156 = sand.u32 %s234, 1
        %s1157 = smul.addr %s1156, 64
        %s1158 = scalar_lea.vmem [#allocation8], %s1157
        // Predicated region
        $region61: #{tpu_custom_call.1} parent=51 // pred_check
          %p1159 = pneg %p244
        $region62: #{tpu_custom_call.1} parent=51 // pred_check_branch
          %1161 = sbr.rel (%p1159) target = $region64
        $region63: #{tpu_custom_call.1} parent=51 // pred_region
          %1163 = vsyncadd %s1155, 0
          %s1164 = smul.addr %s33, 8
          %s1165 = smul.addr %s32, 16
          %s1166 = sadd.s32 %s1164, %s1165
          %s1167 = smul.addr %s1166, 8
          %s1168 = scalar_lea.hbm %s8, %s1167
          %s1169 = sshll.u32 %s1158, 4
          %s1170 = int_to_ptr.vmem [resolvable:$true] %s1169
          %s1171 = sshll.u32 %s1168, 4
          %s1172 = int_to_ptr.hbm [resolvable:$true] %s1171
          %1177 = dma.vmem_to_hbm [thread:$0]  %s1170, 1024, %s1172, %s1155, 128, 128, 8
        $region64: #{tpu_custom_call.1} parent=51 // pred_fallthru
          _
      $region52: #{tpu_custom_call.1} parent=5 // pred_fallthru
        _
      %p1178 = scmp.le.s32.totalorder 2, %s23
      // Predicated region
      $region65: #{tpu_custom_call.1} parent=5 // pred_check
        %p1179 = pneg %p1178
      $region66: #{tpu_custom_call.1} parent=5 // pred_check_branch
        %1181 = sbr.rel (%p1179) target = $region68
      $region67: #{tpu_custom_call.1} parent=5 // pred_region
        %s1182 = ssub.s32 %s23, 2
        // Predicated region
        $region69: #{tpu_custom_call.1} parent=67 // pred_check
          %p1183 = pneg %p250
        $region70: #{tpu_custom_call.1} parent=67 // pred_check_branch
          %1185 = sbr.rel (%p1183) target = $region72
        $region71: #{tpu_custom_call.1} parent=67 // pred_region
          %s1186 = sand.u32 %s235, 1
          %s1187 = scalar_lea.sflag [#allocation5], %s1186
          %s1188 = sand.u32 %s235, 1
          %s1189 = smul.addr %s1188, 64
          %s1190 = scalar_lea.vmem [#allocation8], %s1189
          %1192 = dma.done %s1187, 1024
        $region72: #{tpu_custom_call.1} parent=67 // pred_fallthru
          _
      $region68: #{tpu_custom_call.1} parent=5 // pred_fallthru
        _
    $region6: #{tpu_custom_call.1} parent=1 // loop_footer
      %s27 = sadd.s32 1, %s23
    $region7: #{tpu_custom_call.1} parent=1 // loop_footer_branch
      %22 = sbr.rel target = $region3
    $region8: #{tpu_custom_call.1} parent=1 // loop_exit
      _
    %1193 = vsyncpa [#allocation4], 1
    %s1194 = scalar_lea.sflag [#allocation4], 1
    %1195 = vsyncpa %s1194, 1
    %1196 = vsyncpa [#allocation7], 1
    %s1197 = scalar_lea.sflag [#allocation7], 1
    %1198 = vsyncpa %s1197, 1
    %1199 = vsyncpa [#allocation5], 1
    %s1200 = scalar_lea.sflag [#allocation5], 1
    %1201 = vsyncpa %s1200, 1

</llo_original>
